<compile_context>
chip_gen: v6e
topology: v6e:2x2x1
jax: 0.10.0
libtpu: 0.0.40
codegen_flags: <defaults>
</compile_context>

<pallas_src>
import functools
import math

import jax
import jax.numpy as jnp
from jax import lax
from jax.experimental import pallas as pl
from jax.experimental.pallas import tpu as pltpu


def _mha_kernel(q_ref, k_ref, v_ref,
                wq_ref, bq_ref, wk_ref, bk_ref, wv_ref, bv_ref,
                wo_ref, bo_ref, o_ref, *, num_heads, dim_qh, dim_kh):
    f32 = jnp.float32
    mxu = wq_ref.dtype              # f32 for the tight check; bf16 on v6e/v7x path

    x_q = q_ref[...].astype(mxu)    # (block_s, dim) query tile
    x_k = k_ref[...].astype(mxu)    # (Sk, dim)
    x_v = v_ref[...].astype(mxu)    # (Sk, dim)

    # One lane-dense projection each for Q/K/V covering ALL heads
    # (N = H*dim_k = 128 lanes).  1/sqrt(dim_q) already folded into Wq/bq.
    qa = jnp.dot(x_q, wq_ref[...], preferred_element_type=f32) + bq_ref[...]
    ka = jnp.dot(x_k, wk_ref[...], preferred_element_type=f32) + bk_ref[...]
    va = jnp.dot(x_v, wv_ref[...], preferred_element_type=f32) + bv_ref[...]
    qa = qa.astype(mxu)
    ka = ka.astype(mxu)
    va = va.astype(mxu)

    heads = []
    for h in range(num_heads):      # unrolled; static 16-lane slices of one lane tile
        q_h = qa[:, h * dim_qh:(h + 1) * dim_qh]     # (block_s, dim_q)
        k_h = ka[:, h * dim_kh:(h + 1) * dim_kh]     # (Sk, dim_k)
        v_h = va[:, h * dim_kh:(h + 1) * dim_kh]     # (Sk, dim_k)

        # q_h @ k_h^T: contract the feature (lane) dim of both operands, so no
        # explicit K transpose is materialized in the kernel body.
        s = lax.dot_general(q_h, k_h, (((1,), (1,)), ((), ())),
                            preferred_element_type=f32)          # (block_s, Sk)

        # softmax over the key axis (== torch f.softmax(score, dim=1) for 2-D
        # scores), kept in f32: exp on the EUP, reductions on the XLU,
        # denominator via the EUP approximate reciprocal.
        s = s - jnp.max(s, axis=-1, keepdims=True)
        p = jnp.exp(s)
        inv_l = pl.reciprocal(jnp.sum(p, axis=-1, keepdims=True), approx=True)
        head = jnp.dot(p.astype(mxu), v_h, preferred_element_type=f32) * inv_l
        heads.append(head)          # (block_s, dim_k), f32

    # Fused output projection: lane-concat the heads into one (block_s, 128)
    # tensor, single K=128 matmul against packed Wo, bias added once.
    cat = jnp.concatenate(heads, axis=-1).astype(wo_ref.dtype)
    out = jnp.dot(cat, wo_ref[...], preferred_element_type=f32) + bo_ref[...]
    o_ref[...] = out.astype(o_ref.dtype)


def mha_pallas(query, key, value, packed, *, block_s=256):
    """query/key/value: (S, dim) f32.  packed: see pack_params().  Returns (S, dim) f32."""
    S, dim = query.shape
    Sk = key.shape[0]
    H = packed["num_heads"]
    dim_qh = packed["wq"].shape[1] // H
    dim_kh = packed["wk"].shape[1] // H
    assert dim_qh == dim_kh, "q @ k^T requires dim_q == dim_k (as in the torch module)"

    # Query-sequence tiling keeps VMEM bounded at large S and gives the parallel
    # axis >= 2 steps (both v7x TensorCores) once S >= 2*block_s.
    block_s = min(block_s, S)
    grid = (pl.cdiv(S, block_s),)   # ragged tail -> padded query tile; rows are
                                    # independent and keys stay full, so no mask needed

    def whole(arr):
        nd = arr.ndim
        return pl.BlockSpec(arr.shape, lambda i, _nd=nd: (0,) * _nd)

    grid_spec = pltpu.PrefetchScalarGridSpec(
        num_scalar_prefetch=0,
        grid=grid,
        in_specs=[
            pl.BlockSpec((block_s, dim), lambda i: (i, 0)),   # query tile
            pl.BlockSpec((Sk, dim), lambda i: (0, 0)),        # key   (full, resident)
            pl.BlockSpec((Sk, dim), lambda i: (0, 0)),        # value (full, resident)
            whole(packed["wq"]), whole(packed["bq"]),         # packed (dim, H*dq), (1, H*dq)
            whole(packed["wk"]), whole(packed["bk"]),
            whole(packed["wv"]), whole(packed["bv"]),
            whole(packed["wo"]), whole(packed["bo"]),         # (H*dk, dim), (1, dim)
        ],
        out_specs=pl.BlockSpec((block_s, dim), lambda i: (i, 0)),
    )

    return pl.pallas_call(
        functools.partial(_mha_kernel, num_heads=H, dim_qh=dim_qh, dim_kh=dim_kh),
        out_shape=jax.ShapeDtypeStruct((S, dim), jnp.float32),
        grid_spec=grid_spec,
        compiler_params=pltpu.CompilerParams(
            dimension_semantics=("parallel",)),
    )(query, key, value,
      packed["wq"], packed["bq"], packed["wk"], packed["bk"],
      packed["wv"], packed["bv"], packed["wo"], packed["bo"])


def pack_params(params, dim_q, mxu_dtype=jnp.float32):
    """Pack per-head weights lane-dense (heads concatenated along the last axis),
    fold the 1/sqrt(dim_q) scale into Wq/bq, and store MXU weights in `mxu_dtype`
    (use bf16 on v6e/v7x).  Biases stay f32 (they are VPU adds, not MXU operands)."""
    H, dim, _ = params["wq"].shape
    dk = params["wk"].shape[2]
    scale = 1.0 / math.sqrt(dim_q)

    def pack_w(w):   # (H, dim, d) -> (dim, H*d): column h*d + j == w[h][:, j]
        return jnp.transpose(w, (1, 0, 2)).reshape(dim, -1)

    def pack_b(b):   # (H, 1, d) -> (1, H*d)
        return b.reshape(1, -1)

    return {
        "num_heads": H,
        "wq": (pack_w(params["wq"]) * scale).astype(mxu_dtype),
        "bq": (pack_b(params["bq"]) * scale).astype(jnp.float32),
        "wk": pack_w(params["wk"]).astype(mxu_dtype),
        "bk": pack_b(params["bk"]).astype(jnp.float32),
        "wv": pack_w(params["wv"]).astype(mxu_dtype),
        "bv": pack_b(params["bv"]).astype(jnp.float32),
        "wo": params["wo"].reshape(H * dk, dim).astype(mxu_dtype),
        "bo": params["bo"].astype(jnp.float32),
    }


def mha_reference(query, key, value, params):
    """Pure-JAX reference matching the torch module semantics (2-D inputs)."""
    H, dim, dim_k = params["wq"].shape
    heads = []
    for h in range(H):
        q = query @ params["wq"][h] + params["bq"][h, 0]
        k = key @ params["wk"][h] + params["bk"][h, 0]
        v = value @ params["wv"][h] + params["bv"][h, 0]
        score = (q @ k.T) / math.sqrt(q.shape[-1])
        p = jax.nn.softmax(score, axis=1)        # dim=1 == key axis for 2-D score
        heads.append(p @ v)
    cat = jnp.concatenate(heads, axis=-1)        # (S, H*dim_k)
    wo_full = params["wo"].reshape(H * dim_k, dim)
    return cat @ wo_full + params["bo"][0]


def init_params(key, dim, dim_q, dim_k, num_heads):
    # dim_v is overridden to dim_k inside AttnHead; dim_q must equal dim_k for
    # q @ k^T to be well-formed, as in the torch module.
    keys = jax.random.split(key, 8)
    s = 0.05
    return {
        "wq": s * jax.random.normal(keys[0], (num_heads, dim, dim_q), jnp.float32),
        "bq": s * jax.random.normal(keys[1], (num_heads, 1, dim_q), jnp.float32),
        "wk": s * jax.random.normal(keys[2], (num_heads, dim, dim_k), jnp.float32),
        "bk": s * jax.random.normal(keys[3], (num_heads, 1, dim_k), jnp.float32),
        "wv": s * jax.random.normal(keys[4], (num_heads, dim, dim_k), jnp.float32),
        "bv": s * jax.random.normal(keys[5], (num_heads, 1, dim_k), jnp.float32),
        "wo": s * jax.random.normal(keys[6], (num_heads, dim_k, dim), jnp.float32),
        "bo": s * jax.random.normal(keys[7], (1, dim), jnp.float32),
    }


if __name__ == "__main__":
    dim, dim_q, dim_k, num_heads, seq = 32, 16, 16, 8, 8

    root = jax.random.PRNGKey(0)
    kp, kq, kk, kv = jax.random.split(root, 4)
    params = init_params(kp, dim, dim_q, dim_k, num_heads)

    query = jax.random.normal(kq, (seq, dim), jnp.float32)
    key = jax.random.normal(kk, (seq, dim), jnp.float32)
    value = jax.random.normal(kv, (seq, dim), jnp.float32)

    ref = mha_reference(query, key, value, params)

    # f32 MXU operands: tight check (tolerance covers the approx EUP reciprocal).
    out_f32 = mha_pallas(query, key, value, pack_params(params, dim_q))
    out_f32 = jax.block_until_ready(out_f32)
    assert out_f32.shape == (seq, dim)
    assert jnp.allclose(out_f32, ref, atol=5e-3, rtol=5e-3), (
        f"f32 max abs err {jnp.max(jnp.abs(out_f32 - ref))}")

    # bf16 MXU operands (the v6e/v7x production setting): looser smoke check;
    # softmax path and matmul accumulation remain f32 inside the kernel.
    out_bf16 = mha_pallas(
        query, key, value, pack_params(params, dim_q, mxu_dtype=jnp.bfloat16))
    out_bf16 = jax.block_until_ready(out_bf16)
    assert jnp.allclose(out_bf16, ref, atol=3e-2, rtol=3e-2), (
        f"bf16 max abs err {jnp.max(jnp.abs(out_bf16 - ref))}")

    print("KERNEL_OK")
</pallas_src>

<mosaic_0001>
module attributes {stable_mosaic.version = 11 : i64} {
  func.func @_mha_kernel(%arg0: i32, %arg1: memref<8x32xf32, #tpu.memory_space<vmem>>, %arg2: memref<8x32xf32, #tpu.memory_space<vmem>>, %arg3: memref<8x32xf32, #tpu.memory_space<vmem>>, %arg4: memref<32x128xf32, #tpu.memory_space<vmem>>, %arg5: memref<1x128xf32, #tpu.memory_space<vmem>>, %arg6: memref<32x128xf32, #tpu.memory_space<vmem>>, %arg7: memref<1x128xf32, #tpu.memory_space<vmem>>, %arg8: memref<32x128xf32, #tpu.memory_space<vmem>>, %arg9: memref<1x128xf32, #tpu.memory_space<vmem>>, %arg10: memref<128x32xf32, #tpu.memory_space<vmem>>, %arg11: memref<1x32xf32, #tpu.memory_space<vmem>>, %arg12: memref<8x32xf32, #tpu.memory_space<vmem>>) attributes {dimension_semantics = [#tpu.dimension_semantics<parallel>], iteration_bounds = array<i64: 1>, scalar_prefetch = 0 : i64, scratch_operands = 0 : i64, tpu.core_type = #tpu.core_type<tc>, window_params = [{transform_indices = @transform_0, window_bounds = array<i64: 8, 32>}, {pipeline_mode = #tpu.pipeline_mode<synchronous>, transform_indices = @transform_1, window_bounds = array<i64: 8, 32>}, {pipeline_mode = #tpu.pipeline_mode<synchronous>, transform_indices = @transform_2, window_bounds = array<i64: 8, 32>}, {pipeline_mode = #tpu.pipeline_mode<synchronous>, transform_indices = @transform_3, window_bounds = array<i64: 32, 128>}, {pipeline_mode = #tpu.pipeline_mode<synchronous>, transform_indices = @transform_4, window_bounds = array<i64: 1, 128>}, {pipeline_mode = #tpu.pipeline_mode<synchronous>, transform_indices = @transform_5, window_bounds = array<i64: 32, 128>}, {pipeline_mode = #tpu.pipeline_mode<synchronous>, transform_indices = @transform_6, window_bounds = array<i64: 1, 128>}, {pipeline_mode = #tpu.pipeline_mode<synchronous>, transform_indices = @transform_7, window_bounds = array<i64: 32, 128>}, {pipeline_mode = #tpu.pipeline_mode<synchronous>, transform_indices = @transform_8, window_bounds = array<i64: 1, 128>}, {pipeline_mode = #tpu.pipeline_mode<synchronous>, transform_indices = @transform_9, window_bounds = array<i64: 128, 32>}, {pipeline_mode = #tpu.pipeline_mode<synchronous>, transform_indices = @transform_10, window_bounds = array<i64: 1, 32>}, {transform_indices = @transform_11, window_bounds = array<i64: 8, 32>}]} {
    %c0 = arith.constant 0 : index
    %c0_0 = arith.constant 0 : index
    %0 = vector.load %arg1[%c0, %c0_0] : memref<8x32xf32, #tpu.memory_space<vmem>>, vector<8x32xf32>
    %c0_1 = arith.constant 0 : index
    %c0_2 = arith.constant 0 : index
    %1 = vector.load %arg2[%c0_1, %c0_2] : memref<8x32xf32, #tpu.memory_space<vmem>>, vector<8x32xf32>
    %c0_3 = arith.constant 0 : index
    %c0_4 = arith.constant 0 : index
    %2 = vector.load %arg3[%c0_3, %c0_4] : memref<8x32xf32, #tpu.memory_space<vmem>>, vector<8x32xf32>
    %c0_5 = arith.constant 0 : index
    %c0_6 = arith.constant 0 : index
    %3 = vector.load %arg4[%c0_5, %c0_6] : memref<32x128xf32, #tpu.memory_space<vmem>>, vector<32x128xf32>
    %cst = arith.constant dense<0.000000e+00> : vector<8x128xf32>
    %4 = tpu.matmul %0, %3, %cst {dimension_numbers = #tpu.dot_dimension_numbers<[1], [0], [0], [1], [0, 0, 1, 1], [], []>} : vector<8x32xf32>, vector<32x128xf32>, vector<8x128xf32> -> vector<8x128xf32>
    %c0_7 = arith.constant 0 : index
    %c0_8 = arith.constant 0 : index
    %5 = vector.load %arg5[%c0_7, %c0_8] : memref<1x128xf32, #tpu.memory_space<vmem>>, vector<1x128xf32>
    %6 = vector.broadcast %5 : vector<1x128xf32> to vector<8x128xf32>
    %7 = arith.addf %4, %6 : vector<8x128xf32>
    %c0_9 = arith.constant 0 : index
    %c0_10 = arith.constant 0 : index
    %8 = vector.load %arg6[%c0_9, %c0_10] : memref<32x128xf32, #tpu.memory_space<vmem>>, vector<32x128xf32>
    %cst_11 = arith.constant dense<0.000000e+00> : vector<8x128xf32>
    %9 = tpu.matmul %1, %8, %cst_11 {dimension_numbers = #tpu.dot_dimension_numbers<[1], [0], [0], [1], [0, 0, 1, 1], [], []>} : vector<8x32xf32>, vector<32x128xf32>, vector<8x128xf32> -> vector<8x128xf32>
    %c0_12 = arith.constant 0 : index
    %c0_13 = arith.constant 0 : index
    %10 = vector.load %arg7[%c0_12, %c0_13] : memref<1x128xf32, #tpu.memory_space<vmem>>, vector<1x128xf32>
    %11 = vector.broadcast %10 : vector<1x128xf32> to vector<8x128xf32>
    %12 = arith.addf %9, %11 : vector<8x128xf32>
    %c0_14 = arith.constant 0 : index
    %c0_15 = arith.constant 0 : index
    %13 = vector.load %arg8[%c0_14, %c0_15] : memref<32x128xf32, #tpu.memory_space<vmem>>, vector<32x128xf32>
    %cst_16 = arith.constant dense<0.000000e+00> : vector<8x128xf32>
    %14 = tpu.matmul %2, %13, %cst_16 {dimension_numbers = #tpu.dot_dimension_numbers<[1], [0], [0], [1], [0, 0, 1, 1], [], []>} : vector<8x32xf32>, vector<32x128xf32>, vector<8x128xf32> -> vector<8x128xf32>
    %c0_17 = arith.constant 0 : index
    %c0_18 = arith.constant 0 : index
    %15 = vector.load %arg9[%c0_17, %c0_18] : memref<1x128xf32, #tpu.memory_space<vmem>>, vector<1x128xf32>
    %16 = vector.broadcast %15 : vector<1x128xf32> to vector<8x128xf32>
    %17 = arith.addf %14, %16 : vector<8x128xf32>
    %18 = vector.extract_strided_slice %7 {offsets = [0, 0], sizes = [8, 16], strides = [1, 1]} : vector<8x128xf32> to vector<8x16xf32>
    %19 = vector.extract_strided_slice %12 {offsets = [0, 0], sizes = [8, 16], strides = [1, 1]} : vector<8x128xf32> to vector<8x16xf32>
    %20 = vector.extract_strided_slice %17 {offsets = [0, 0], sizes = [8, 16], strides = [1, 1]} : vector<8x128xf32> to vector<8x16xf32>
    %cst_19 = arith.constant dense<0.000000e+00> : vector<8x8xf32>
    %21 = tpu.matmul %18, %19, %cst_19 {dimension_numbers = #tpu.dot_dimension_numbers<[1], [1], [0], [0], [0, 0, 1, 0], [], []>} : vector<8x16xf32>, vector<8x16xf32>, vector<8x8xf32> -> vector<8x8xf32>
    %cst_20 = arith.constant dense<0xFF800000> : vector<8xf32>
    %22 = vector.multi_reduction <maximumf>, %21, %cst_20 [1] : vector<8x8xf32> to vector<8xf32>
    %23 = vector.shape_cast %22 : vector<8xf32> to vector<8x1xf32>
    %24 = vector.broadcast %23 : vector<8x1xf32> to vector<8x8xf32>
    %25 = arith.subf %21, %24 : vector<8x8xf32>
    %26 = math.exp %25 : vector<8x8xf32>
    %cst_21 = arith.constant dense<0.000000e+00> : vector<8xf32>
    %27 = vector.multi_reduction <add>, %26, %cst_21 [1] : vector<8x8xf32> to vector<8xf32>
    %28 = vector.shape_cast %27 : vector<8xf32> to vector<8x1xf32>
    %29 = tpu.reciprocal %28 {approx = true} : vector<8x1xf32> -> vector<8x1xf32>
    %cst_22 = arith.constant dense<0.000000e+00> : vector<8x16xf32>
    %30 = tpu.matmul %26, %20, %cst_22 {dimension_numbers = #tpu.dot_dimension_numbers<[1], [0], [0], [1], [0, 0, 1, 1], [], []>} : vector<8x8xf32>, vector<8x16xf32>, vector<8x16xf32> -> vector<8x16xf32>
    %31 = vector.broadcast %29 : vector<8x1xf32> to vector<8x16xf32>
    %32 = arith.mulf %30, %31 : vector<8x16xf32>
    %33 = vector.extract_strided_slice %7 {offsets = [0, 16], sizes = [8, 16], strides = [1, 1]} : vector<8x128xf32> to vector<8x16xf32>
    %34 = vector.extract_strided_slice %12 {offsets = [0, 16], sizes = [8, 16], strides = [1, 1]} : vector<8x128xf32> to vector<8x16xf32>
    %35 = vector.extract_strided_slice %17 {offsets = [0, 16], sizes = [8, 16], strides = [1, 1]} : vector<8x128xf32> to vector<8x16xf32>
    %cst_23 = arith.constant dense<0.000000e+00> : vector<8x8xf32>
    %36 = tpu.matmul %33, %34, %cst_23 {dimension_numbers = #tpu.dot_dimension_numbers<[1], [1], [0], [0], [0, 0, 1, 0], [], []>} : vector<8x16xf32>, vector<8x16xf32>, vector<8x8xf32> -> vector<8x8xf32>
    %cst_24 = arith.constant dense<0xFF800000> : vector<8xf32>
    %37 = vector.multi_reduction <maximumf>, %36, %cst_24 [1] : vector<8x8xf32> to vector<8xf32>
    %38 = vector.shape_cast %37 : vector<8xf32> to vector<8x1xf32>
    %39 = vector.broadcast %38 : vector<8x1xf32> to vector<8x8xf32>
    %40 = arith.subf %36, %39 : vector<8x8xf32>
    %41 = math.exp %40 : vector<8x8xf32>
    %cst_25 = arith.constant dense<0.000000e+00> : vector<8xf32>
    %42 = vector.multi_reduction <add>, %41, %cst_25 [1] : vector<8x8xf32> to vector<8xf32>
    %43 = vector.shape_cast %42 : vector<8xf32> to vector<8x1xf32>
    %44 = tpu.reciprocal %43 {approx = true} : vector<8x1xf32> -> vector<8x1xf32>
    %cst_26 = arith.constant dense<0.000000e+00> : vector<8x16xf32>
    %45 = tpu.matmul %41, %35, %cst_26 {dimension_numbers = #tpu.dot_dimension_numbers<[1], [0], [0], [1], [0, 0, 1, 1], [], []>} : vector<8x8xf32>, vector<8x16xf32>, vector<8x16xf32> -> vector<8x16xf32>
    %46 = vector.broadcast %44 : vector<8x1xf32> to vector<8x16xf32>
    %47 = arith.mulf %45, %46 : vector<8x16xf32>
    %48 = vector.extract_strided_slice %7 {offsets = [0, 32], sizes = [8, 16], strides = [1, 1]} : vector<8x128xf32> to vector<8x16xf32>
    %49 = vector.extract_strided_slice %12 {offsets = [0, 32], sizes = [8, 16], strides = [1, 1]} : vector<8x128xf32> to vector<8x16xf32>
    %50 = vector.extract_strided_slice %17 {offsets = [0, 32], sizes = [8, 16], strides = [1, 1]} : vector<8x128xf32> to vector<8x16xf32>
    %cst_27 = arith.constant dense<0.000000e+00> : vector<8x8xf32>
    %51 = tpu.matmul %48, %49, %cst_27 {dimension_numbers = #tpu.dot_dimension_numbers<[1], [1], [0], [0], [0, 0, 1, 0], [], []>} : vector<8x16xf32>, vector<8x16xf32>, vector<8x8xf32> -> vector<8x8xf32>
    %cst_28 = arith.constant dense<0xFF800000> : vector<8xf32>
    %52 = vector.multi_reduction <maximumf>, %51, %cst_28 [1] : vector<8x8xf32> to vector<8xf32>
    %53 = vector.shape_cast %52 : vector<8xf32> to vector<8x1xf32>
    %54 = vector.broadcast %53 : vector<8x1xf32> to vector<8x8xf32>
    %55 = arith.subf %51, %54 : vector<8x8xf32>
    %56 = math.exp %55 : vector<8x8xf32>
    %cst_29 = arith.constant dense<0.000000e+00> : vector<8xf32>
    %57 = vector.multi_reduction <add>, %56, %cst_29 [1] : vector<8x8xf32> to vector<8xf32>
    %58 = vector.shape_cast %57 : vector<8xf32> to vector<8x1xf32>
    %59 = tpu.reciprocal %58 {approx = true} : vector<8x1xf32> -> vector<8x1xf32>
    %cst_30 = arith.constant dense<0.000000e+00> : vector<8x16xf32>
    %60 = tpu.matmul %56, %50, %cst_30 {dimension_numbers = #tpu.dot_dimension_numbers<[1], [0], [0], [1], [0, 0, 1, 1], [], []>} : vector<8x8xf32>, vector<8x16xf32>, vector<8x16xf32> -> vector<8x16xf32>
    %61 = vector.broadcast %59 : vector<8x1xf32> to vector<8x16xf32>
    %62 = arith.mulf %60, %61 : vector<8x16xf32>
    %63 = vector.extract_strided_slice %7 {offsets = [0, 48], sizes = [8, 16], strides = [1, 1]} : vector<8x128xf32> to vector<8x16xf32>
    %64 = vector.extract_strided_slice %12 {offsets = [0, 48], sizes = [8, 16], strides = [1, 1]} : vector<8x128xf32> to vector<8x16xf32>
    %65 = vector.extract_strided_slice %17 {offsets = [0, 48], sizes = [8, 16], strides = [1, 1]} : vector<8x128xf32> to vector<8x16xf32>
    %cst_31 = arith.constant dense<0.000000e+00> : vector<8x8xf32>
    %66 = tpu.matmul %63, %64, %cst_31 {dimension_numbers = #tpu.dot_dimension_numbers<[1], [1], [0], [0], [0, 0, 1, 0], [], []>} : vector<8x16xf32>, vector<8x16xf32>, vector<8x8xf32> -> vector<8x8xf32>
    %cst_32 = arith.constant dense<0xFF800000> : vector<8xf32>
    %67 = vector.multi_reduction <maximumf>, %66, %cst_32 [1] : vector<8x8xf32> to vector<8xf32>
    %68 = vector.shape_cast %67 : vector<8xf32> to vector<8x1xf32>
    %69 = vector.broadcast %68 : vector<8x1xf32> to vector<8x8xf32>
    %70 = arith.subf %66, %69 : vector<8x8xf32>
    %71 = math.exp %70 : vector<8x8xf32>
    %cst_33 = arith.constant dense<0.000000e+00> : vector<8xf32>
    %72 = vector.multi_reduction <add>, %71, %cst_33 [1] : vector<8x8xf32> to vector<8xf32>
    %73 = vector.shape_cast %72 : vector<8xf32> to vector<8x1xf32>
    %74 = tpu.reciprocal %73 {approx = true} : vector<8x1xf32> -> vector<8x1xf32>
    %cst_34 = arith.constant dense<0.000000e+00> : vector<8x16xf32>
    %75 = tpu.matmul %71, %65, %cst_34 {dimension_numbers = #tpu.dot_dimension_numbers<[1], [0], [0], [1], [0, 0, 1, 1], [], []>} : vector<8x8xf32>, vector<8x16xf32>, vector<8x16xf32> -> vector<8x16xf32>
    %76 = vector.broadcast %74 : vector<8x1xf32> to vector<8x16xf32>
    %77 = arith.mulf %75, %76 : vector<8x16xf32>
    %78 = vector.extract_strided_slice %7 {offsets = [0, 64], sizes = [8, 16], strides = [1, 1]} : vector<8x128xf32> to vector<8x16xf32>
    %79 = vector.extract_strided_slice %12 {offsets = [0, 64], sizes = [8, 16], strides = [1, 1]} : vector<8x128xf32> to vector<8x16xf32>
    %80 = vector.extract_strided_slice %17 {offsets = [0, 64], sizes = [8, 16], strides = [1, 1]} : vector<8x128xf32> to vector<8x16xf32>
    %cst_35 = arith.constant dense<0.000000e+00> : vector<8x8xf32>
    %81 = tpu.matmul %78, %79, %cst_35 {dimension_numbers = #tpu.dot_dimension_numbers<[1], [1], [0], [0], [0, 0, 1, 0], [], []>} : vector<8x16xf32>, vector<8x16xf32>, vector<8x8xf32> -> vector<8x8xf32>
    %cst_36 = arith.constant dense<0xFF800000> : vector<8xf32>
    %82 = vector.multi_reduction <maximumf>, %81, %cst_36 [1] : vector<8x8xf32> to vector<8xf32>
    %83 = vector.shape_cast %82 : vector<8xf32> to vector<8x1xf32>
    %84 = vector.broadcast %83 : vector<8x1xf32> to vector<8x8xf32>
    %85 = arith.subf %81, %84 : vector<8x8xf32>
    %86 = math.exp %85 : vector<8x8xf32>
    %cst_37 = arith.constant dense<0.000000e+00> : vector<8xf32>
    %87 = vector.multi_reduction <add>, %86, %cst_37 [1] : vector<8x8xf32> to vector<8xf32>
    %88 = vector.shape_cast %87 : vector<8xf32> to vector<8x1xf32>
    %89 = tpu.reciprocal %88 {approx = true} : vector<8x1xf32> -> vector<8x1xf32>
    %cst_38 = arith.constant dense<0.000000e+00> : vector<8x16xf32>
    %90 = tpu.matmul %86, %80, %cst_38 {dimension_numbers = #tpu.dot_dimension_numbers<[1], [0], [0], [1], [0, 0, 1, 1], [], []>} : vector<8x8xf32>, vector<8x16xf32>, vector<8x16xf32> -> vector<8x16xf32>
    %91 = vector.broadcast %89 : vector<8x1xf32> to vector<8x16xf32>
    %92 = arith.mulf %90, %91 : vector<8x16xf32>
    %93 = vector.extract_strided_slice %7 {offsets = [0, 80], sizes = [8, 16], strides = [1, 1]} : vector<8x128xf32> to vector<8x16xf32>
    %94 = vector.extract_strided_slice %12 {offsets = [0, 80], sizes = [8, 16], strides = [1, 1]} : vector<8x128xf32> to vector<8x16xf32>
    %95 = vector.extract_strided_slice %17 {offsets = [0, 80], sizes = [8, 16], strides = [1, 1]} : vector<8x128xf32> to vector<8x16xf32>
    %cst_39 = arith.constant dense<0.000000e+00> : vector<8x8xf32>
    %96 = tpu.matmul %93, %94, %cst_39 {dimension_numbers = #tpu.dot_dimension_numbers<[1], [1], [0], [0], [0, 0, 1, 0], [], []>} : vector<8x16xf32>, vector<8x16xf32>, vector<8x8xf32> -> vector<8x8xf32>
    %cst_40 = arith.constant dense<0xFF800000> : vector<8xf32>
    %97 = vector.multi_reduction <maximumf>, %96, %cst_40 [1] : vector<8x8xf32> to vector<8xf32>
    %98 = vector.shape_cast %97 : vector<8xf32> to vector<8x1xf32>
    %99 = vector.broadcast %98 : vector<8x1xf32> to vector<8x8xf32>
    %100 = arith.subf %96, %99 : vector<8x8xf32>
    %101 = math.exp %100 : vector<8x8xf32>
    %cst_41 = arith.constant dense<0.000000e+00> : vector<8xf32>
    %102 = vector.multi_reduction <add>, %101, %cst_41 [1] : vector<8x8xf32> to vector<8xf32>
    %103 = vector.shape_cast %102 : vector<8xf32> to vector<8x1xf32>
    %104 = tpu.reciprocal %103 {approx = true} : vector<8x1xf32> -> vector<8x1xf32>
    %cst_42 = arith.constant dense<0.000000e+00> : vector<8x16xf32>
    %105 = tpu.matmul %101, %95, %cst_42 {dimension_numbers = #tpu.dot_dimension_numbers<[1], [0], [0], [1], [0, 0, 1, 1], [], []>} : vector<8x8xf32>, vector<8x16xf32>, vector<8x16xf32> -> vector<8x16xf32>
    %106 = vector.broadcast %104 : vector<8x1xf32> to vector<8x16xf32>
    %107 = arith.mulf %105, %106 : vector<8x16xf32>
    %108 = vector.extract_strided_slice %7 {offsets = [0, 96], sizes = [8, 16], strides = [1, 1]} : vector<8x128xf32> to vector<8x16xf32>
    %109 = vector.extract_strided_slice %12 {offsets = [0, 96], sizes = [8, 16], strides = [1, 1]} : vector<8x128xf32> to vector<8x16xf32>
    %110 = vector.extract_strided_slice %17 {offsets = [0, 96], sizes = [8, 16], strides = [1, 1]} : vector<8x128xf32> to vector<8x16xf32>
    %cst_43 = arith.constant dense<0.000000e+00> : vector<8x8xf32>
    %111 = tpu.matmul %108, %109, %cst_43 {dimension_numbers = #tpu.dot_dimension_numbers<[1], [1], [0], [0], [0, 0, 1, 0], [], []>} : vector<8x16xf32>, vector<8x16xf32>, vector<8x8xf32> -> vector<8x8xf32>
    %cst_44 = arith.constant dense<0xFF800000> : vector<8xf32>
    %112 = vector.multi_reduction <maximumf>, %111, %cst_44 [1] : vector<8x8xf32> to vector<8xf32>
    %113 = vector.shape_cast %112 : vector<8xf32> to vector<8x1xf32>
    %114 = vector.broadcast %113 : vector<8x1xf32> to vector<8x8xf32>
    %115 = arith.subf %111, %114 : vector<8x8xf32>
    %116 = math.exp %115 : vector<8x8xf32>
    %cst_45 = arith.constant dense<0.000000e+00> : vector<8xf32>
    %117 = vector.multi_reduction <add>, %116, %cst_45 [1] : vector<8x8xf32> to vector<8xf32>
    %118 = vector.shape_cast %117 : vector<8xf32> to vector<8x1xf32>
    %119 = tpu.reciprocal %118 {approx = true} : vector<8x1xf32> -> vector<8x1xf32>
    %cst_46 = arith.constant dense<0.000000e+00> : vector<8x16xf32>
    %120 = tpu.matmul %116, %110, %cst_46 {dimension_numbers = #tpu.dot_dimension_numbers<[1], [0], [0], [1], [0, 0, 1, 1], [], []>} : vector<8x8xf32>, vector<8x16xf32>, vector<8x16xf32> -> vector<8x16xf32>
    %121 = vector.broadcast %119 : vector<8x1xf32> to vector<8x16xf32>
    %122 = arith.mulf %120, %121 : vector<8x16xf32>
    %123 = vector.extract_strided_slice %7 {offsets = [0, 112], sizes = [8, 16], strides = [1, 1]} : vector<8x128xf32> to vector<8x16xf32>
    %124 = vector.extract_strided_slice %12 {offsets = [0, 112], sizes = [8, 16], strides = [1, 1]} : vector<8x128xf32> to vector<8x16xf32>
    %125 = vector.extract_strided_slice %17 {offsets = [0, 112], sizes = [8, 16], strides = [1, 1]} : vector<8x128xf32> to vector<8x16xf32>
    %cst_47 = arith.constant dense<0.000000e+00> : vector<8x8xf32>
    %126 = tpu.matmul %123, %124, %cst_47 {dimension_numbers = #tpu.dot_dimension_numbers<[1], [1], [0], [0], [0, 0, 1, 0], [], []>} : vector<8x16xf32>, vector<8x16xf32>, vector<8x8xf32> -> vector<8x8xf32>
    %cst_48 = arith.constant dense<0xFF800000> : vector<8xf32>
    %127 = vector.multi_reduction <maximumf>, %126, %cst_48 [1] : vector<8x8xf32> to vector<8xf32>
    %128 = vector.shape_cast %127 : vector<8xf32> to vector<8x1xf32>
    %129 = vector.broadcast %128 : vector<8x1xf32> to vector<8x8xf32>
    %130 = arith.subf %126, %129 : vector<8x8xf32>
    %131 = math.exp %130 : vector<8x8xf32>
    %cst_49 = arith.constant dense<0.000000e+00> : vector<8xf32>
    %132 = vector.multi_reduction <add>, %131, %cst_49 [1] : vector<8x8xf32> to vector<8xf32>
    %133 = vector.shape_cast %132 : vector<8xf32> to vector<8x1xf32>
    %134 = tpu.reciprocal %133 {approx = true} : vector<8x1xf32> -> vector<8x1xf32>
    %cst_50 = arith.constant dense<0.000000e+00> : vector<8x16xf32>
    %135 = tpu.matmul %131, %125, %cst_50 {dimension_numbers = #tpu.dot_dimension_numbers<[1], [0], [0], [1], [0, 0, 1, 1], [], []>} : vector<8x8xf32>, vector<8x16xf32>, vector<8x16xf32> -> vector<8x16xf32>
    %136 = vector.broadcast %134 : vector<8x1xf32> to vector<8x16xf32>
    %137 = arith.mulf %135, %136 : vector<8x16xf32>
    %138 = tpu.concatenate %32, %47, %62, %77, %92, %107, %122, %137 in 1 : vector<8x16xf32>, vector<8x16xf32>, vector<8x16xf32>, vector<8x16xf32>, vector<8x16xf32>, vector<8x16xf32>, vector<8x16xf32>, vector<8x16xf32> -> vector<8x128xf32>
    %c0_51 = arith.constant 0 : index
    %c0_52 = arith.constant 0 : index
    %139 = vector.load %arg10[%c0_51, %c0_52] : memref<128x32xf32, #tpu.memory_space<vmem>>, vector<128x32xf32>
    %cst_53 = arith.constant dense<0.000000e+00> : vector<8x32xf32>
    %140 = tpu.matmul %138, %139, %cst_53 {dimension_numbers = #tpu.dot_dimension_numbers<[1], [0], [0], [1], [0, 0, 1, 1], [], []>} : vector<8x128xf32>, vector<128x32xf32>, vector<8x32xf32> -> vector<8x32xf32>
    %c0_54 = arith.constant 0 : index
    %c0_55 = arith.constant 0 : index
    %141 = vector.load %arg11[%c0_54, %c0_55] : memref<1x32xf32, #tpu.memory_space<vmem>>, vector<1x32xf32>
    %142 = vector.broadcast %141 : vector<1x32xf32> to vector<8x32xf32>
    %143 = arith.addf %140, %142 : vector<8x32xf32>
    %c0_56 = arith.constant 0 : index
    %c0_57 = arith.constant 0 : index
    %144 = vector.load %arg12[%c0_56, %c0_57] : memref<8x32xf32, #tpu.memory_space<vmem>>, vector<8x32xf32>
    tpu.vector_store %arg12[%c0_56, %c0_57], %143 {strides = array<i32>} : memref<8x32xf32, #tpu.memory_space<vmem>>, vector<8x32xf32>,
    return
  }
  func.func @transform_0(%arg0: i32) -> (i32, i32) {
    %c0_i32 = arith.constant 0 : i32
    %c0_i32_0 = arith.constant 0 : i32
    return %arg0, %c0_i32 : i32, i32
  }
  func.func @transform_1(%arg0: i32) -> (i32, i32) {
    %c0_i32 = arith.constant 0 : i32
    %c0_i32_0 = arith.constant 0 : i32
    %c0_i32_1 = arith.constant 0 : i32
    return %c0_i32, %c0_i32_0 : i32, i32
  }
  func.func @transform_2(%arg0: i32) -> (i32, i32) {
    %c0_i32 = arith.constant 0 : i32
    %c0_i32_0 = arith.constant 0 : i32
    %c0_i32_1 = arith.constant 0 : i32
    return %c0_i32, %c0_i32_0 : i32, i32
  }
  func.func @transform_3(%arg0: i32) -> (i32, i32) {
    %c0_i32 = arith.constant 0 : i32
    %c0_i32_0 = arith.constant 0 : i32
    %c0_i32_1 = arith.constant 0 : i32
    return %c0_i32, %c0_i32_0 : i32, i32
  }
  func.func @transform_4(%arg0: i32) -> (i32, i32) {
    %c0_i32 = arith.constant 0 : i32
    %c0_i32_0 = arith.constant 0 : i32
    %c0_i32_1 = arith.constant 0 : i32
    return %c0_i32, %c0_i32_0 : i32, i32
  }
  func.func @transform_5(%arg0: i32) -> (i32, i32) {
    %c0_i32 = arith.constant 0 : i32
    %c0_i32_0 = arith.constant 0 : i32
    %c0_i32_1 = arith.constant 0 : i32
    return %c0_i32, %c0_i32_0 : i32, i32
  }
  func.func @transform_6(%arg0: i32) -> (i32, i32) {
    %c0_i32 = arith.constant 0 : i32
    %c0_i32_0 = arith.constant 0 : i32
    %c0_i32_1 = arith.constant 0 : i32
    return %c0_i32, %c0_i32_0 : i32, i32
  }
  func.func @transform_7(%arg0: i32) -> (i32, i32) {
    %c0_i32 = arith.constant 0 : i32
    %c0_i32_0 = arith.constant 0 : i32
    %c0_i32_1 = arith.constant 0 : i32
    return %c0_i32, %c0_i32_0 : i32, i32
  }
  func.func @transform_8(%arg0: i32) -> (i32, i32) {
    %c0_i32 = arith.constant 0 : i32
    %c0_i32_0 = arith.constant 0 : i32
    %c0_i32_1 = arith.constant 0 : i32
    return %c0_i32, %c0_i32_0 : i32, i32
  }
  func.func @transform_9(%arg0: i32) -> (i32, i32) {
    %c0_i32 = arith.constant 0 : i32
    %c0_i32_0 = arith.constant 0 : i32
    %c0_i32_1 = arith.constant 0 : i32
    return %c0_i32, %c0_i32_0 : i32, i32
  }
  func.func @transform_10(%arg0: i32) -> (i32, i32) {
    %c0_i32 = arith.constant 0 : i32
    %c0_i32_0 = arith.constant 0 : i32
    %c0_i32_1 = arith.constant 0 : i32
    return %c0_i32, %c0_i32_0 : i32, i32
  }
  func.func @transform_11(%arg0: i32) -> (i32, i32) {
    %c0_i32 = arith.constant 0 : i32
    %c0_i32_0 = arith.constant 0 : i32
    return %arg0, %c0_i32 : i32, i32
  }
}

</mosaic_0001>

<llo_original>
// kernel: tpu_custom_call.1
$region0: #{tpu_custom_call.1}
  #allocation0 [shape = 'u32[]', space=smem, size = 0x4, offset = 0x4, fixed_abs, tag = 'smem constant byte address 0x4 - core index']
  #allocation1 [shape = 'u32[144,128]{1,0:T(1,128)}', space=vmem, size = 0x12000, scoped, tag = 'internal scratch']
  %s0 = inlined_call_operand.vmem [shape: f32[8,32], index: 0, kind: input, shape index: {}]
  %s1 = inlined_call_operand.vmem [shape: f32[8,32], index: 1, kind: input, shape index: {}]
  %s2 = inlined_call_operand.vmem [shape: f32[8,32], index: 2, kind: input, shape index: {}]
  %s3 = inlined_call_operand.vmem [shape: f32[32,128], index: 3, kind: input, shape index: {}]
  %s4 = inlined_call_operand.vmem [shape: f32[1,128], index: 4, kind: input, shape index: {}]
  %s5 = inlined_call_operand.vmem [shape: f32[32,128], index: 5, kind: input, shape index: {}]
  %s6 = inlined_call_operand.vmem [shape: f32[1,128], index: 6, kind: input, shape index: {}]
  %s7 = inlined_call_operand.vmem [shape: f32[32,128], index: 7, kind: input, shape index: {}]
  %s8 = inlined_call_operand.vmem [shape: f32[1,128], index: 8, kind: input, shape index: {}]
  %s9 = inlined_call_operand.vmem [shape: f32[128,32], index: 9, kind: input, shape index: {}]
  %s10 = inlined_call_operand.vmem [shape: f32[1,32], index: 10, kind: input, shape index: {}]
  %s11 = inlined_call_operand.hbm [shape: f32[8,32], index: 11, kind: output, shape index: {}]
  %s12 = sld [smem:[#allocation0]]
  $region54: #{tpu_custom_call.1} parent=0
    _
  %s14 = ssub.s32 1, %s12
  %s15 = scalar_select 0, %s14, %s12
  $region1: #{tpu_custom_call.1} parent=0
    #allocation2 [shape = 'u8[4096]{0}', space=vmem, size = 0x1000, scoped, tag = 'output window, operand 0, single buffered']
    #allocation3 [shape = 's32[1]{0}', space=sflag, size = 0x4, scoped, tag = 'scoped memory for tpu_custom_call.1']
    %16 = vsyncpa [#allocation3], 0
    // Predicated region
    $region2: #{tpu_custom_call.1} parent=1 // pred_check
      _
    $region3: #{tpu_custom_call.1} parent=1 // pred_check_branch
      %18 = sbr.rel (0) target = $region5
    $region4: #{tpu_custom_call.1} parent=1 // pred_region
      _
    $region5: #{tpu_custom_call.1} parent=1 // pred_fallthru
      _
    // Predicated region
    $region6: #{tpu_custom_call.1} parent=1 // pred_check
      _
    $region7: #{tpu_custom_call.1} parent=1 // pred_check_branch
      %20 = sbr.rel (0) target = $region9
    $region8: #{tpu_custom_call.1} parent=1 // pred_region
      _
    $region9: #{tpu_custom_call.1} parent=1 // pred_fallthru
      _
    // Predicated region
    $region10: #{tpu_custom_call.1} parent=1 // pred_check
      _
    $region11: #{tpu_custom_call.1} parent=1 // pred_check_branch
      %22 = sbr.rel (0) target = $region13
    $region12: #{tpu_custom_call.1} parent=1 // pred_region
      _
    $region13: #{tpu_custom_call.1} parent=1 // pred_fallthru
      _
    // Predicated region
    $region14: #{tpu_custom_call.1} parent=1 // pred_check
      _
    $region15: #{tpu_custom_call.1} parent=1 // pred_check_branch
      %24 = sbr.rel (0) target = $region17
    $region16: #{tpu_custom_call.1} parent=1 // pred_region
      _
    $region17: #{tpu_custom_call.1} parent=1 // pred_fallthru
      _
    // Predicated region
    $region18: #{tpu_custom_call.1} parent=1 // pred_check
      _
    $region19: #{tpu_custom_call.1} parent=1 // pred_check_branch
      %26 = sbr.rel (0) target = $region21
    $region20: #{tpu_custom_call.1} parent=1 // pred_region
      _
    $region21: #{tpu_custom_call.1} parent=1 // pred_fallthru
      _
    // Predicated region
    $region22: #{tpu_custom_call.1} parent=1 // pred_check
      _
    $region23: #{tpu_custom_call.1} parent=1 // pred_check_branch
      %28 = sbr.rel (0) target = $region25
    $region24: #{tpu_custom_call.1} parent=1 // pred_region
      _
    $region25: #{tpu_custom_call.1} parent=1 // pred_fallthru
      _
    // Predicated region
    $region26: #{tpu_custom_call.1} parent=1 // pred_check
      _
    $region27: #{tpu_custom_call.1} parent=1 // pred_check_branch
      %30 = sbr.rel (0) target = $region29
    $region28: #{tpu_custom_call.1} parent=1 // pred_region
      _
    $region29: #{tpu_custom_call.1} parent=1 // pred_fallthru
      _
    // Predicated region
    $region30: #{tpu_custom_call.1} parent=1 // pred_check
      _
    $region31: #{tpu_custom_call.1} parent=1 // pred_check_branch
      %32 = sbr.rel (0) target = $region33
    $region32: #{tpu_custom_call.1} parent=1 // pred_region
      _
    $region33: #{tpu_custom_call.1} parent=1 // pred_fallthru
      _
    // Predicated region
    $region34: #{tpu_custom_call.1} parent=1 // pred_check
      _
    $region35: #{tpu_custom_call.1} parent=1 // pred_check_branch
      %34 = sbr.rel (0) target = $region37
    $region36: #{tpu_custom_call.1} parent=1 // pred_region
      _
    $region37: #{tpu_custom_call.1} parent=1 // pred_fallthru
      _
    // Predicated region
    $region38: #{tpu_custom_call.1} parent=1 // pred_check
      _
    $region39: #{tpu_custom_call.1} parent=1 // pred_check_branch
      %36 = sbr.rel (0) target = $region41
    $region40: #{tpu_custom_call.1} parent=1 // pred_region
      _
    $region41: #{tpu_custom_call.1} parent=1 // pred_fallthru
      _
    // Predicated region
    $region42: #{tpu_custom_call.1} parent=1 // pred_check
      _
    $region43: #{tpu_custom_call.1} parent=1 // pred_check_branch
      %38 = sbr.rel (0) target = $region45
    $region44: #{tpu_custom_call.1} parent=1 // pred_region
      _
    $region45: #{tpu_custom_call.1} parent=1 // pred_fallthru
      _
    %v39 = vld [vmem:[%s0] sm:$0xff]
    %v40 = vld [vmem:[%s1] sm:$0xff]
    %v41 = vld [vmem:[%s2] sm:$0xff]
    %v42 = vld [vmem:[%s3] sm:$0xff]
    %v43 = vld [vmem:[%s3 + $0x8] sm:$0xff]
    %v44 = vld [vmem:[%s3 + $0x10] sm:$0xff]
    %v45 = vld [vmem:[%s3 + $0x18] sm:$0xff]
    %v46 = vld [vmem:[%s4] sm:$0x1]
    %v48 = vlaneseq
    %v49 = vshrl.u32 %v48, 7
    %v50 = vsub.s32 0, %v49
    %v51 = vrot.slane %v46, %v50
    %vm53 = vcmask 261120
    %v55 = vsel %vm53, %v39, 0
    %57 = vmatprep.subr.mxu0 0.0
    %58 = vmatpush1.msra.mxu0 0.0
    %59 = vmatprep.subr.mxu0 0.0
    %60 = vmatpush1.msra.mxu0 0.0
    %61 = vmatprep.subr.mxu0 0.0
    %62 = vmatpush1.msra.mxu0 0.0
    %63 = vmatprep.subr.mxu0 0.0
    %64 = vmatpush1.msra.mxu0 0.0
    %65 = vmatprep.subr.mxu0 0.0
    %66 = vmatpush1.msra.mxu0 0.0
    %67 = vmatprep.subr.mxu0 0.0
    %68 = vmatpush1.msra.mxu0 0.0
    %69 = vmatprep.subr.mxu0 0.0
    %70 = vmatpush1.msra.mxu0 0.0
    %71 = vmatprep.subr.mxu0 0.0
    %72 = vmatpush1.msra.mxu0 0.0
    %73 = vmatprep.subr.mxu0 0.0
    %74 = vmatpush1.msra.mxu0 0.0
    %75 = vmatprep.subr.mxu0 0.0
    %76 = vmatpush1.msra.mxu0 0.0
    %77 = vmatprep.subr.mxu0 0.0
    %78 = vmatpush1.msra.mxu0 0.0
    %79 = vmatprep.subr.mxu0 0.0
    %80 = vmatpush1.msra.mxu0 0.0
    %81 = vmatprep.subr.mxu0 0.0
    %82 = vmatpush1.msra.mxu0 %v45
    %83 = vmatprep.subr.mxu0 0.0
    %84 = vmatpush1.msra.mxu0 %v44
    %85 = vmatprep.subr.mxu0 0.0
    %86 = vmatpush1.msra.mxu0 %v43
    %87 = vmatprep.subr.mxu0 0.0
    %88 = vmatpush1.msra.mxu0 %v42
    %89 = vmatprep.subr.mxu0 0.0
    %90 = vmatpush2.msra.mxu0 0.0
    %91 = vmatprep.subr.mxu0 0.0
    %92 = vmatpush2.msra.mxu0 0.0
    %93 = vmatprep.subr.mxu0 0.0
    %94 = vmatpush2.msra.mxu0 0.0
    %95 = vmatprep.subr.mxu0 0.0
    %96 = vmatpush2.msra.mxu0 0.0
    %97 = vmatprep.subr.mxu0 0.0
    %98 = vmatpush2.msra.mxu0 0.0
    %99 = vmatprep.subr.mxu0 0.0
    %100 = vmatpush2.msra.mxu0 0.0
    %101 = vmatprep.subr.mxu0 0.0
    %102 = vmatpush2.msra.mxu0 0.0
    %103 = vmatprep.subr.mxu0 0.0
    %104 = vmatpush2.msra.mxu0 0.0
    %105 = vmatprep.subr.mxu0 0.0
    %106 = vmatpush2.msra.mxu0 0.0
    %107 = vmatprep.subr.mxu0 0.0
    %108 = vmatpush2.msra.mxu0 0.0
    %109 = vmatprep.subr.mxu0 0.0
    %110 = vmatpush2.msra.mxu0 0.0
    %111 = vmatprep.subr.mxu0 0.0
    %112 = vmatpush2.msra.mxu0 0.0
    %113 = vmatprep.subr.mxu0 0.0
    %114 = vmatpush2.msra.mxu0 0.0
    %115 = vmatprep.subr.mxu0 0.0
    %116 = vmatpush2.msra.mxu0 0.0
    %117 = vmatprep.subr.mxu0 0.0
    %118 = vmatpush2.msra.mxu0 0.0
    %119 = vmatprep.subr.mxu0 0.0
    %120 = vmatpush2.msra.mxu0 0.0
    %121 = vmatprep.mubr.f32.mxu0 0.0
    %122 = vmatmul.mubr.f32.gmra.mxu0 %v55
    %v123 = vpop.f32.mrf.mxu0
    %v124 = vadd.f32 %v51, %v123
    %v125 = vpop.f32.mrf.mxu0
    %126 = vdwg.mxu0
    %v127 = vld [vmem:[%s5] sm:$0xff]
    %v128 = vld [vmem:[%s5 + $0x8] sm:$0xff]
    %v129 = vld [vmem:[%s5 + $0x10] sm:$0xff]
    %v130 = vld [vmem:[%s5 + $0x18] sm:$0xff]
    %v131 = vld [vmem:[%s6] sm:$0x1]
    %v133 = vlaneseq
    %v134 = vshrl.u32 %v133, 7
    %v135 = vsub.s32 0, %v134
    %v136 = vrot.slane %v131, %v135
    %v139 = vsel %vm53, %v40, 0
    %141 = vmatprep.subr.mxu0 0.0
    %142 = vmatpush1.msra.mxu0 0.0
    %143 = vmatprep.subr.mxu0 0.0
    %144 = vmatpush1.msra.mxu0 0.0
    %145 = vmatprep.subr.mxu0 0.0
    %146 = vmatpush1.msra.mxu0 0.0
    %147 = vmatprep.subr.mxu0 0.0
    %148 = vmatpush1.msra.mxu0 0.0
    %149 = vmatprep.subr.mxu0 0.0
    %150 = vmatpush1.msra.mxu0 0.0
    %151 = vmatprep.subr.mxu0 0.0
    %152 = vmatpush1.msra.mxu0 0.0
    %153 = vmatprep.subr.mxu0 0.0
    %154 = vmatpush1.msra.mxu0 0.0
    %155 = vmatprep.subr.mxu0 0.0
    %156 = vmatpush1.msra.mxu0 0.0
    %157 = vmatprep.subr.mxu0 0.0
    %158 = vmatpush1.msra.mxu0 0.0
    %159 = vmatprep.subr.mxu0 0.0
    %160 = vmatpush1.msra.mxu0 0.0
    %161 = vmatprep.subr.mxu0 0.0
    %162 = vmatpush1.msra.mxu0 0.0
    %163 = vmatprep.subr.mxu0 0.0
    %164 = vmatpush1.msra.mxu0 0.0
    %165 = vmatprep.subr.mxu0 0.0
    %166 = vmatpush1.msra.mxu0 %v130
    %167 = vmatprep.subr.mxu0 0.0
    %168 = vmatpush1.msra.mxu0 %v129
    %169 = vmatprep.subr.mxu0 0.0
    %170 = vmatpush1.msra.mxu0 %v128
    %171 = vmatprep.subr.mxu0 0.0
    %172 = vmatpush1.msra.mxu0 %v127
    %173 = vmatprep.subr.mxu0 0.0
    %174 = vmatpush2.msra.mxu0 0.0
    %175 = vmatprep.subr.mxu0 0.0
    %176 = vmatpush2.msra.mxu0 0.0
    %177 = vmatprep.subr.mxu0 0.0
    %178 = vmatpush2.msra.mxu0 0.0
    %179 = vmatprep.subr.mxu0 0.0
    %180 = vmatpush2.msra.mxu0 0.0
    %181 = vmatprep.subr.mxu0 0.0
    %182 = vmatpush2.msra.mxu0 0.0
    %183 = vmatprep.subr.mxu0 0.0
    %184 = vmatpush2.msra.mxu0 0.0
    %185 = vmatprep.subr.mxu0 0.0
    %186 = vmatpush2.msra.mxu0 0.0
    %187 = vmatprep.subr.mxu0 0.0
    %188 = vmatpush2.msra.mxu0 0.0
    %189 = vmatprep.subr.mxu0 0.0
    %190 = vmatpush2.msra.mxu0 0.0
    %191 = vmatprep.subr.mxu0 0.0
    %192 = vmatpush2.msra.mxu0 0.0
    %193 = vmatprep.subr.mxu0 0.0
    %194 = vmatpush2.msra.mxu0 0.0
    %195 = vmatprep.subr.mxu0 0.0
    %196 = vmatpush2.msra.mxu0 0.0
    %197 = vmatprep.subr.mxu0 0.0
    %198 = vmatpush2.msra.mxu0 0.0
    %199 = vmatprep.subr.mxu0 0.0
    %200 = vmatpush2.msra.mxu0 0.0
    %201 = vmatprep.subr.mxu0 0.0
    %202 = vmatpush2.msra.mxu0 0.0
    %203 = vmatprep.subr.mxu0 0.0
    %204 = vmatpush2.msra.mxu0 0.0
    %205 = vmatprep.mubr.f32.mxu0 0.0
    %206 = vmatmul.mubr.f32.gmra.mxu0 %v139
    %v207 = vpop.f32.mrf.mxu0
    %v208 = vadd.f32 %v136, %v207
    %v209 = vpop.f32.mrf.mxu0
    %210 = vdwg.mxu0
    %v211 = vld [vmem:[%s7] sm:$0xff]
    %v212 = vld [vmem:[%s7 + $0x8] sm:$0xff]
    %v213 = vld [vmem:[%s7 + $0x10] sm:$0xff]
    %v214 = vld [vmem:[%s7 + $0x18] sm:$0xff]
    %v215 = vld [vmem:[%s8] sm:$0x1]
    %v217 = vlaneseq
    %v218 = vshrl.u32 %v217, 7
    %v219 = vsub.s32 0, %v218
    %v220 = vrot.slane %v215, %v219
    %v223 = vsel %vm53, %v41, 0
    %225 = vmatprep.subr.mxu0 0.0
    %226 = vmatpush1.msra.mxu0 0.0
    %227 = vmatprep.subr.mxu0 0.0
    %228 = vmatpush1.msra.mxu0 0.0
    %229 = vmatprep.subr.mxu0 0.0
    %230 = vmatpush1.msra.mxu0 0.0
    %231 = vmatprep.subr.mxu0 0.0
    %232 = vmatpush1.msra.mxu0 0.0
    %233 = vmatprep.subr.mxu0 0.0
    %234 = vmatpush1.msra.mxu0 0.0
    %235 = vmatprep.subr.mxu0 0.0
    %236 = vmatpush1.msra.mxu0 0.0
    %237 = vmatprep.subr.mxu0 0.0
    %238 = vmatpush1.msra.mxu0 0.0
    %239 = vmatprep.subr.mxu0 0.0
    %240 = vmatpush1.msra.mxu0 0.0
    %241 = vmatprep.subr.mxu0 0.0
    %242 = vmatpush1.msra.mxu0 0.0
    %243 = vmatprep.subr.mxu0 0.0
    %244 = vmatpush1.msra.mxu0 0.0
    %245 = vmatprep.subr.mxu0 0.0
    %246 = vmatpush1.msra.mxu0 0.0
    %247 = vmatprep.subr.mxu0 0.0
    %248 = vmatpush1.msra.mxu0 0.0
    %249 = vmatprep.subr.mxu0 0.0
    %250 = vmatpush1.msra.mxu0 %v214
    %251 = vmatprep.subr.mxu0 0.0
    %252 = vmatpush1.msra.mxu0 %v213
    %253 = vmatprep.subr.mxu0 0.0
    %254 = vmatpush1.msra.mxu0 %v212
    %255 = vmatprep.subr.mxu0 0.0
    %256 = vmatpush1.msra.mxu0 %v211
    %257 = vmatprep.subr.mxu0 0.0
    %258 = vmatpush2.msra.mxu0 0.0
    %259 = vmatprep.subr.mxu0 0.0
    %260 = vmatpush2.msra.mxu0 0.0
    %261 = vmatprep.subr.mxu0 0.0
    %262 = vmatpush2.msra.mxu0 0.0
    %263 = vmatprep.subr.mxu0 0.0
    %264 = vmatpush2.msra.mxu0 0.0
    %265 = vmatprep.subr.mxu0 0.0
    %266 = vmatpush2.msra.mxu0 0.0
    %267 = vmatprep.subr.mxu0 0.0
    %268 = vmatpush2.msra.mxu0 0.0
    %269 = vmatprep.subr.mxu0 0.0
    %270 = vmatpush2.msra.mxu0 0.0
    %271 = vmatprep.subr.mxu0 0.0
    %272 = vmatpush2.msra.mxu0 0.0
    %273 = vmatprep.subr.mxu0 0.0
    %274 = vmatpush2.msra.mxu0 0.0
    %275 = vmatprep.subr.mxu0 0.0
    %276 = vmatpush2.msra.mxu0 0.0
    %277 = vmatprep.subr.mxu0 0.0
    %278 = vmatpush2.msra.mxu0 0.0
    %279 = vmatprep.subr.mxu0 0.0
    %280 = vmatpush2.msra.mxu0 0.0
    %281 = vmatprep.subr.mxu0 0.0
    %282 = vmatpush2.msra.mxu0 0.0
    %283 = vmatprep.subr.mxu0 0.0
    %284 = vmatpush2.msra.mxu0 0.0
    %285 = vmatprep.subr.mxu0 0.0
    %286 = vmatpush2.msra.mxu0 0.0
    %287 = vmatprep.subr.mxu0 0.0
    %288 = vmatpush2.msra.mxu0 0.0
    %289 = vmatprep.mubr.f32.mxu0 0.0
    %290 = vmatmul.mubr.f32.gmra.mxu0 %v223
    %v291 = vpop.f32.mrf.mxu0
    %v292 = vadd.f32 %v220, %v291
    %v293 = vpop.f32.mrf.mxu0
    %294 = vdwg.mxu0
    %vm295 = vcmask 130048
    %v297 = vsel %vm295, %v124, 0
    %v300 = vsel %vm295, %v208, 0
    %302 = vmatprep.subr.mxu0 0.0
    %303 = vmatpush1.xpose.msra.mxu0 0.0
    %304 = vmatprep.subr.mxu0 0.0
    %305 = vmatpush1.xpose.msra.mxu0 0.0
    %306 = vmatprep.subr.mxu0 0.0
    %307 = vmatpush1.xpose.msra.mxu0 0.0
    %308 = vmatprep.subr.mxu0 0.0
    %309 = vmatpush1.xpose.msra.mxu0 0.0
    %310 = vmatprep.subr.mxu0 0.0
    %311 = vmatpush1.xpose.msra.mxu0 0.0
    %312 = vmatprep.subr.mxu0 0.0
    %313 = vmatpush1.xpose.msra.mxu0 0.0
    %314 = vmatprep.subr.mxu0 0.0
    %315 = vmatpush1.xpose.msra.mxu0 0.0
    %316 = vmatprep.subr.mxu0 0.0
    %317 = vmatpush1.xpose.msra.mxu0 0.0
    %318 = vmatprep.subr.mxu0 0.0
    %319 = vmatpush1.xpose.msra.mxu0 0.0
    %320 = vmatprep.subr.mxu0 0.0
    %321 = vmatpush1.xpose.msra.mxu0 0.0
    %322 = vmatprep.subr.mxu0 0.0
    %323 = vmatpush1.xpose.msra.mxu0 0.0
    %324 = vmatprep.subr.mxu0 0.0
    %325 = vmatpush1.xpose.msra.mxu0 0.0
    %326 = vmatprep.subr.mxu0 0.0
    %327 = vmatpush1.xpose.msra.mxu0 0.0
    %328 = vmatprep.subr.mxu0 0.0
    %329 = vmatpush1.xpose.msra.mxu0 0.0
    %330 = vmatprep.subr.mxu0 0.0
    %331 = vmatpush1.xpose.msra.mxu0 0.0
    %332 = vmatprep.subr.mxu0 0.0
    %333 = vmatpush1.xpose.msra.mxu0 %v300
    %334 = vmatprep.subr.mxu0 0.0
    %335 = vmatpush2.xpose.msra.mxu0 0.0
    %336 = vmatprep.subr.mxu0 0.0
    %337 = vmatpush2.xpose.msra.mxu0 0.0
    %338 = vmatprep.subr.mxu0 0.0
    %339 = vmatpush2.xpose.msra.mxu0 0.0
    %340 = vmatprep.subr.mxu0 0.0
    %341 = vmatpush2.xpose.msra.mxu0 0.0
    %342 = vmatprep.subr.mxu0 0.0
    %343 = vmatpush2.xpose.msra.mxu0 0.0
    %344 = vmatprep.subr.mxu0 0.0
    %345 = vmatpush2.xpose.msra.mxu0 0.0
    %346 = vmatprep.subr.mxu0 0.0
    %347 = vmatpush2.xpose.msra.mxu0 0.0
    %348 = vmatprep.subr.mxu0 0.0
    %349 = vmatpush2.xpose.msra.mxu0 0.0
    %350 = vmatprep.subr.mxu0 0.0
    %351 = vmatpush2.xpose.msra.mxu0 0.0
    %352 = vmatprep.subr.mxu0 0.0
    %353 = vmatpush2.xpose.msra.mxu0 0.0
    %354 = vmatprep.subr.mxu0 0.0
    %355 = vmatpush2.xpose.msra.mxu0 0.0
    %356 = vmatprep.subr.mxu0 0.0
    %357 = vmatpush2.xpose.msra.mxu0 0.0
    %358 = vmatprep.subr.mxu0 0.0
    %359 = vmatpush2.xpose.msra.mxu0 0.0
    %360 = vmatprep.subr.mxu0 0.0
    %361 = vmatpush2.xpose.msra.mxu0 0.0
    %362 = vmatprep.subr.mxu0 0.0
    %363 = vmatpush2.xpose.msra.mxu0 0.0
    %364 = vmatprep.subr.mxu0 0.0
    %365 = vmatpush2.xpose.msra.mxu0 0.0
    %366 = vmatprep.mubr.f32.mxu0 0.0
    %367 = vmatmul.mubr.f32.gmra.mxu0 %v297
    %v368 = vpop.f32.mrf.mxu0
    %v369 = vadd.f32 0.0, %v368
    %v370 = vpop.f32.mrf.mxu0
    %371 = vdwg.mxu0
    %vm372 = vcmask 64512
    %v373 = vsel %vm372, %v369, -inf
    %374 = vmax.xlane.f32.xlu0 %v373
    %v375 = vpop.xlane.xlu0 %374
    %v376 = vsub.f32 %v369, %v375
    %v377 = vmul.f32 %v376, 1.442695
    %v378 = vpow.pop %v377
    %v379 = vsel %vm372, %v378, 0.0
    %380 = vadd.xlane.f32.xlu0 %v379
    %v381 = vpop.xlane.xlu0 %380
    %v382 = vrcp.pop %v381
    %v384 = vsel %vm372, %v378, 0
    %386 = vmatprep.subr.mxu0 0.0
    %387 = vmatpush1.msra.mxu0 0.0
    %388 = vmatprep.subr.mxu0 0.0
    %389 = vmatpush1.msra.mxu0 0.0
    %390 = vmatprep.subr.mxu0 0.0
    %391 = vmatpush1.msra.mxu0 0.0
    %392 = vmatprep.subr.mxu0 0.0
    %393 = vmatpush1.msra.mxu0 0.0
    %394 = vmatprep.subr.mxu0 0.0
    %395 = vmatpush1.msra.mxu0 0.0
    %396 = vmatprep.subr.mxu0 0.0
    %397 = vmatpush1.msra.mxu0 0.0
    %398 = vmatprep.subr.mxu0 0.0
    %399 = vmatpush1.msra.mxu0 0.0
    %400 = vmatprep.subr.mxu0 0.0
    %401 = vmatpush1.msra.mxu0 0.0
    %402 = vmatprep.subr.mxu0 0.0
    %403 = vmatpush1.msra.mxu0 0.0
    %404 = vmatprep.subr.mxu0 0.0
    %405 = vmatpush1.msra.mxu0 0.0
    %406 = vmatprep.subr.mxu0 0.0
    %407 = vmatpush1.msra.mxu0 0.0
    %408 = vmatprep.subr.mxu0 0.0
    %409 = vmatpush1.msra.mxu0 0.0
    %410 = vmatprep.subr.mxu0 0.0
    %411 = vmatpush1.msra.mxu0 0.0
    %412 = vmatprep.subr.mxu0 0.0
    %413 = vmatpush1.msra.mxu0 0.0
    %414 = vmatprep.subr.mxu0 0.0
    %415 = vmatpush1.msra.mxu0 0.0
    %416 = vmatprep.subr.mxu0 0.0
    %417 = vmatpush1.msra.mxu0 %v292
    %418 = vmatprep.subr.mxu0 0.0
    %419 = vmatpush2.msra.mxu0 0.0
    %420 = vmatprep.subr.mxu0 0.0
    %421 = vmatpush2.msra.mxu0 0.0
    %422 = vmatprep.subr.mxu0 0.0
    %423 = vmatpush2.msra.mxu0 0.0
    %424 = vmatprep.subr.mxu0 0.0
    %425 = vmatpush2.msra.mxu0 0.0
    %426 = vmatprep.subr.mxu0 0.0
    %427 = vmatpush2.msra.mxu0 0.0
    %428 = vmatprep.subr.mxu0 0.0
    %429 = vmatpush2.msra.mxu0 0.0
    %430 = vmatprep.subr.mxu0 0.0
    %431 = vmatpush2.msra.mxu0 0.0
    %432 = vmatprep.subr.mxu0 0.0
    %433 = vmatpush2.msra.mxu0 0.0
    %434 = vmatprep.subr.mxu0 0.0
    %435 = vmatpush2.msra.mxu0 0.0
    %436 = vmatprep.subr.mxu0 0.0
    %437 = vmatpush2.msra.mxu0 0.0
    %438 = vmatprep.subr.mxu0 0.0
    %439 = vmatpush2.msra.mxu0 0.0
    %440 = vmatprep.subr.mxu0 0.0
    %441 = vmatpush2.msra.mxu0 0.0
    %442 = vmatprep.subr.mxu0 0.0
    %443 = vmatpush2.msra.mxu0 0.0
    %444 = vmatprep.subr.mxu0 0.0
    %445 = vmatpush2.msra.mxu0 0.0
    %446 = vmatprep.subr.mxu0 0.0
    %447 = vmatpush2.msra.mxu0 0.0
    %448 = vmatprep.subr.mxu0 0.0
    %449 = vmatpush2.msra.mxu0 0.0
    %450 = vmatprep.mubr.f32.mxu0 0.0
    %451 = vmatmul.mubr.f32.gmra.mxu0 %v384
    %v452 = vpop.f32.mrf.mxu0
    %v453 = vadd.f32 0.0, %v452
    %v454 = vpop.f32.mrf.mxu0
    %455 = vdwg.mxu0
    %v456 = vmul.f32 %v453, %v382
    %457 = vrot.lane.b32.xlu0 %v124, 112
    %v458 = vpop.permute.xlu0 %457
    %459 = vrot.lane.b32.xlu0 %v208, 112
    %v460 = vpop.permute.xlu0 %459
    %v461 = vsel %vm295, %v458, 0
    %v463 = vsel %vm295, %v460, 0
    %465 = vmatprep.subr.mxu0 0.0
    %466 = vmatpush1.xpose.msra.mxu0 0.0
    %467 = vmatprep.subr.mxu0 0.0
    %468 = vmatpush1.xpose.msra.mxu0 0.0
    %469 = vmatprep.subr.mxu0 0.0
    %470 = vmatpush1.xpose.msra.mxu0 0.0
    %471 = vmatprep.subr.mxu0 0.0
    %472 = vmatpush1.xpose.msra.mxu0 0.0
    %473 = vmatprep.subr.mxu0 0.0
    %474 = vmatpush1.xpose.msra.mxu0 0.0
    %475 = vmatprep.subr.mxu0 0.0
    %476 = vmatpush1.xpose.msra.mxu0 0.0
    %477 = vmatprep.subr.mxu0 0.0
    %478 = vmatpush1.xpose.msra.mxu0 0.0
    %479 = vmatprep.subr.mxu0 0.0
    %480 = vmatpush1.xpose.msra.mxu0 0.0
    %481 = vmatprep.subr.mxu0 0.0
    %482 = vmatpush1.xpose.msra.mxu0 0.0
    %483 = vmatprep.subr.mxu0 0.0
    %484 = vmatpush1.xpose.msra.mxu0 0.0
    %485 = vmatprep.subr.mxu0 0.0
    %486 = vmatpush1.xpose.msra.mxu0 0.0
    %487 = vmatprep.subr.mxu0 0.0
    %488 = vmatpush1.xpose.msra.mxu0 0.0
    %489 = vmatprep.subr.mxu0 0.0
    %490 = vmatpush1.xpose.msra.mxu0 0.0
    %491 = vmatprep.subr.mxu0 0.0
    %492 = vmatpush1.xpose.msra.mxu0 0.0
    %493 = vmatprep.subr.mxu0 0.0
    %494 = vmatpush1.xpose.msra.mxu0 0.0
    %495 = vmatprep.subr.mxu0 0.0
    %496 = vmatpush1.xpose.msra.mxu0 %v463
    %497 = vmatprep.subr.mxu0 0.0
    %498 = vmatpush2.xpose.msra.mxu0 0.0
    %499 = vmatprep.subr.mxu0 0.0
    %500 = vmatpush2.xpose.msra.mxu0 0.0
    %501 = vmatprep.subr.mxu0 0.0
    %502 = vmatpush2.xpose.msra.mxu0 0.0
    %503 = vmatprep.subr.mxu0 0.0
    %504 = vmatpush2.xpose.msra.mxu0 0.0
    %505 = vmatprep.subr.mxu0 0.0
    %506 = vmatpush2.xpose.msra.mxu0 0.0
    %507 = vmatprep.subr.mxu0 0.0
    %508 = vmatpush2.xpose.msra.mxu0 0.0
    %509 = vmatprep.subr.mxu0 0.0
    %510 = vmatpush2.xpose.msra.mxu0 0.0
    %511 = vmatprep.subr.mxu0 0.0
    %512 = vmatpush2.xpose.msra.mxu0 0.0
    %513 = vmatprep.subr.mxu0 0.0
    %514 = vmatpush2.xpose.msra.mxu0 0.0
    %515 = vmatprep.subr.mxu0 0.0
    %516 = vmatpush2.xpose.msra.mxu0 0.0
    %517 = vmatprep.subr.mxu0 0.0
    %518 = vmatpush2.xpose.msra.mxu0 0.0
    %519 = vmatprep.subr.mxu0 0.0
    %520 = vmatpush2.xpose.msra.mxu0 0.0
    %521 = vmatprep.subr.mxu0 0.0
    %522 = vmatpush2.xpose.msra.mxu0 0.0
    %523 = vmatprep.subr.mxu0 0.0
    %524 = vmatpush2.xpose.msra.mxu0 0.0
    %525 = vmatprep.subr.mxu0 0.0
    %526 = vmatpush2.xpose.msra.mxu0 0.0
    %527 = vmatprep.subr.mxu0 0.0
    %528 = vmatpush2.xpose.msra.mxu0 0.0
    %529 = vmatprep.mubr.f32.mxu0 0.0
    %530 = vmatmul.mubr.f32.gmra.mxu0 %v461
    %v531 = vpop.f32.mrf.mxu0
    %v532 = vadd.f32 0.0, %v531
    %v533 = vpop.f32.mrf.mxu0
    %534 = vdwg.mxu0
    %v535 = vsel %vm372, %v532, -inf
    %536 = vmax.xlane.f32.xlu0 %v535
    %v537 = vpop.xlane.xlu0 %536
    %v538 = vsub.f32 %v532, %v537
    %v539 = vmul.f32 %v538, 1.442695
    %v540 = vpow.pop %v539
    %v541 = vsel %vm372, %v540, 0.0
    %542 = vadd.xlane.f32.xlu0 %v541
    %v543 = vpop.xlane.xlu0 %542
    %v544 = vrcp.pop %v543
    %546 = vrot.lane.b32.xlu0 %v292, 112
    %v547 = vpop.permute.xlu0 %546
    %v550 = vsel %vm372, %v540, 0
    %552 = vmatprep.subr.mxu0 0.0
    %553 = vmatpush1.msra.mxu0 0.0
    %554 = vmatprep.subr.mxu0 0.0
    %555 = vmatpush1.msra.mxu0 0.0
    %556 = vmatprep.subr.mxu0 0.0
    %557 = vmatpush1.msra.mxu0 0.0
    %558 = vmatprep.subr.mxu0 0.0
    %559 = vmatpush1.msra.mxu0 0.0
    %560 = vmatprep.subr.mxu0 0.0
    %561 = vmatpush1.msra.mxu0 0.0
    %562 = vmatprep.subr.mxu0 0.0
    %563 = vmatpush1.msra.mxu0 0.0
    %564 = vmatprep.subr.mxu0 0.0
    %565 = vmatpush1.msra.mxu0 0.0
    %566 = vmatprep.subr.mxu0 0.0
    %567 = vmatpush1.msra.mxu0 0.0
    %568 = vmatprep.subr.mxu0 0.0
    %569 = vmatpush1.msra.mxu0 0.0
    %570 = vmatprep.subr.mxu0 0.0
    %571 = vmatpush1.msra.mxu0 0.0
    %572 = vmatprep.subr.mxu0 0.0
    %573 = vmatpush1.msra.mxu0 0.0
    %574 = vmatprep.subr.mxu0 0.0
    %575 = vmatpush1.msra.mxu0 0.0
    %576 = vmatprep.subr.mxu0 0.0
    %577 = vmatpush1.msra.mxu0 0.0
    %578 = vmatprep.subr.mxu0 0.0
    %579 = vmatpush1.msra.mxu0 0.0
    %580 = vmatprep.subr.mxu0 0.0
    %581 = vmatpush1.msra.mxu0 0.0
    %582 = vmatprep.subr.mxu0 0.0
    %583 = vmatpush1.msra.mxu0 %v547
    %584 = vmatprep.subr.mxu0 0.0
    %585 = vmatpush2.msra.mxu0 0.0
    %586 = vmatprep.subr.mxu0 0.0
    %587 = vmatpush2.msra.mxu0 0.0
    %588 = vmatprep.subr.mxu0 0.0
    %589 = vmatpush2.msra.mxu0 0.0
    %590 = vmatprep.subr.mxu0 0.0
    %591 = vmatpush2.msra.mxu0 0.0
    %592 = vmatprep.subr.mxu0 0.0
    %593 = vmatpush2.msra.mxu0 0.0
    %594 = vmatprep.subr.mxu0 0.0
    %595 = vmatpush2.msra.mxu0 0.0
    %596 = vmatprep.subr.mxu0 0.0
    %597 = vmatpush2.msra.mxu0 0.0
    %598 = vmatprep.subr.mxu0 0.0
    %599 = vmatpush2.msra.mxu0 0.0
    %600 = vmatprep.subr.mxu0 0.0
    %601 = vmatpush2.msra.mxu0 0.0
    %602 = vmatprep.subr.mxu0 0.0
    %603 = vmatpush2.msra.mxu0 0.0
    %604 = vmatprep.subr.mxu0 0.0
    %605 = vmatpush2.msra.mxu0 0.0
    %606 = vmatprep.subr.mxu0 0.0
    %607 = vmatpush2.msra.mxu0 0.0
    %608 = vmatprep.subr.mxu0 0.0
    %609 = vmatpush2.msra.mxu0 0.0
    %610 = vmatprep.subr.mxu0 0.0
    %611 = vmatpush2.msra.mxu0 0.0
    %612 = vmatprep.subr.mxu0 0.0
    %613 = vmatpush2.msra.mxu0 0.0
    %614 = vmatprep.subr.mxu0 0.0
    %615 = vmatpush2.msra.mxu0 0.0
    %616 = vmatprep.mubr.f32.mxu0 0.0
    %617 = vmatmul.mubr.f32.gmra.mxu0 %v550
    %v618 = vpop.f32.mrf.mxu0
    %v619 = vadd.f32 0.0, %v618
    %v620 = vpop.f32.mrf.mxu0
    %621 = vdwg.mxu0
    %v622 = vmul.f32 %v619, %v544
    %623 = vrot.lane.b32.xlu0 %v124, 96
    %v624 = vpop.permute.xlu0 %623
    %625 = vrot.lane.b32.xlu0 %v208, 96
    %v626 = vpop.permute.xlu0 %625
    %v627 = vsel %vm295, %v624, 0
    %v629 = vsel %vm295, %v626, 0
    %631 = vmatprep.subr.mxu0 0.0
    %632 = vmatpush1.xpose.msra.mxu0 0.0
    %633 = vmatprep.subr.mxu0 0.0
    %634 = vmatpush1.xpose.msra.mxu0 0.0
    %635 = vmatprep.subr.mxu0 0.0
    %636 = vmatpush1.xpose.msra.mxu0 0.0
    %637 = vmatprep.subr.mxu0 0.0
    %638 = vmatpush1.xpose.msra.mxu0 0.0
    %639 = vmatprep.subr.mxu0 0.0
    %640 = vmatpush1.xpose.msra.mxu0 0.0
    %641 = vmatprep.subr.mxu0 0.0
    %642 = vmatpush1.xpose.msra.mxu0 0.0
    %643 = vmatprep.subr.mxu0 0.0
    %644 = vmatpush1.xpose.msra.mxu0 0.0
    %645 = vmatprep.subr.mxu0 0.0
    %646 = vmatpush1.xpose.msra.mxu0 0.0
    %647 = vmatprep.subr.mxu0 0.0
    %648 = vmatpush1.xpose.msra.mxu0 0.0
    %649 = vmatprep.subr.mxu0 0.0
    %650 = vmatpush1.xpose.msra.mxu0 0.0
    %651 = vmatprep.subr.mxu0 0.0
    %652 = vmatpush1.xpose.msra.mxu0 0.0
    %653 = vmatprep.subr.mxu0 0.0
    %654 = vmatpush1.xpose.msra.mxu0 0.0
    %655 = vmatprep.subr.mxu0 0.0
    %656 = vmatpush1.xpose.msra.mxu0 0.0
    %657 = vmatprep.subr.mxu0 0.0
    %658 = vmatpush1.xpose.msra.mxu0 0.0
    %659 = vmatprep.subr.mxu0 0.0
    %660 = vmatpush1.xpose.msra.mxu0 0.0
    %661 = vmatprep.subr.mxu0 0.0
    %662 = vmatpush1.xpose.msra.mxu0 %v629
    %663 = vmatprep.subr.mxu0 0.0
    %664 = vmatpush2.xpose.msra.mxu0 0.0
    %665 = vmatprep.subr.mxu0 0.0
    %666 = vmatpush2.xpose.msra.mxu0 0.0
    %667 = vmatprep.subr.mxu0 0.0
    %668 = vmatpush2.xpose.msra.mxu0 0.0
    %669 = vmatprep.subr.mxu0 0.0
    %670 = vmatpush2.xpose.msra.mxu0 0.0
    %671 = vmatprep.subr.mxu0 0.0
    %672 = vmatpush2.xpose.msra.mxu0 0.0
    %673 = vmatprep.subr.mxu0 0.0
    %674 = vmatpush2.xpose.msra.mxu0 0.0
    %675 = vmatprep.subr.mxu0 0.0
    %676 = vmatpush2.xpose.msra.mxu0 0.0
    %677 = vmatprep.subr.mxu0 0.0
    %678 = vmatpush2.xpose.msra.mxu0 0.0
    %679 = vmatprep.subr.mxu0 0.0
    %680 = vmatpush2.xpose.msra.mxu0 0.0
    %681 = vmatprep.subr.mxu0 0.0
    %682 = vmatpush2.xpose.msra.mxu0 0.0
    %683 = vmatprep.subr.mxu0 0.0
    %684 = vmatpush2.xpose.msra.mxu0 0.0
    %685 = vmatprep.subr.mxu0 0.0
    %686 = vmatpush2.xpose.msra.mxu0 0.0
    %687 = vmatprep.subr.mxu0 0.0
    %688 = vmatpush2.xpose.msra.mxu0 0.0
    %689 = vmatprep.subr.mxu0 0.0
    %690 = vmatpush2.xpose.msra.mxu0 0.0
    %691 = vmatprep.subr.mxu0 0.0
    %692 = vmatpush2.xpose.msra.mxu0 0.0
    %693 = vmatprep.subr.mxu0 0.0
    %694 = vmatpush2.xpose.msra.mxu0 0.0
    %695 = vmatprep.mubr.f32.mxu0 0.0
    %696 = vmatmul.mubr.f32.gmra.mxu0 %v627
    %v697 = vpop.f32.mrf.mxu0
    %v698 = vadd.f32 0.0, %v697
    %v699 = vpop.f32.mrf.mxu0
    %700 = vdwg.mxu0
    %v701 = vsel %vm372, %v698, -inf
    %702 = vmax.xlane.f32.xlu0 %v701
    %v703 = vpop.xlane.xlu0 %702
    %v704 = vsub.f32 %v698, %v703
    %v705 = vmul.f32 %v704, 1.442695
    %v706 = vpow.pop %v705
    %v707 = vsel %vm372, %v706, 0.0
    %708 = vadd.xlane.f32.xlu0 %v707
    %v709 = vpop.xlane.xlu0 %708
    %v710 = vrcp.pop %v709
    %711 = vrot.lane.b32.xlu0 %v292, 96
    %v712 = vpop.permute.xlu0 %711
    %v715 = vsel %vm372, %v706, 0
    %717 = vmatprep.subr.mxu0 0.0
    %718 = vmatpush1.msra.mxu0 0.0
    %719 = vmatprep.subr.mxu0 0.0
    %720 = vmatpush1.msra.mxu0 0.0
    %721 = vmatprep.subr.mxu0 0.0
    %722 = vmatpush1.msra.mxu0 0.0
    %723 = vmatprep.subr.mxu0 0.0
    %724 = vmatpush1.msra.mxu0 0.0
    %725 = vmatprep.subr.mxu0 0.0
    %726 = vmatpush1.msra.mxu0 0.0
    %727 = vmatprep.subr.mxu0 0.0
    %728 = vmatpush1.msra.mxu0 0.0
    %729 = vmatprep.subr.mxu0 0.0
    %730 = vmatpush1.msra.mxu0 0.0
    %731 = vmatprep.subr.mxu0 0.0
    %732 = vmatpush1.msra.mxu0 0.0
    %733 = vmatprep.subr.mxu0 0.0
    %734 = vmatpush1.msra.mxu0 0.0
    %735 = vmatprep.subr.mxu0 0.0
    %736 = vmatpush1.msra.mxu0 0.0
    %737 = vmatprep.subr.mxu0 0.0
    %738 = vmatpush1.msra.mxu0 0.0
    %739 = vmatprep.subr.mxu0 0.0
    %740 = vmatpush1.msra.mxu0 0.0
    %741 = vmatprep.subr.mxu0 0.0
    %742 = vmatpush1.msra.mxu0 0.0
    %743 = vmatprep.subr.mxu0 0.0
    %744 = vmatpush1.msra.mxu0 0.0
    %745 = vmatprep.subr.mxu0 0.0
    %746 = vmatpush1.msra.mxu0 0.0
    %747 = vmatprep.subr.mxu0 0.0
    %748 = vmatpush1.msra.mxu0 %v712
    %749 = vmatprep.subr.mxu0 0.0
    %750 = vmatpush2.msra.mxu0 0.0
    %751 = vmatprep.subr.mxu0 0.0
    %752 = vmatpush2.msra.mxu0 0.0
    %753 = vmatprep.subr.mxu0 0.0
    %754 = vmatpush2.msra.mxu0 0.0
    %755 = vmatprep.subr.mxu0 0.0
    %756 = vmatpush2.msra.mxu0 0.0
    %757 = vmatprep.subr.mxu0 0.0
    %758 = vmatpush2.msra.mxu0 0.0
    %759 = vmatprep.subr.mxu0 0.0
    %760 = vmatpush2.msra.mxu0 0.0
    %761 = vmatprep.subr.mxu0 0.0
    %762 = vmatpush2.msra.mxu0 0.0
    %763 = vmatprep.subr.mxu0 0.0
    %764 = vmatpush2.msra.mxu0 0.0
    %765 = vmatprep.subr.mxu0 0.0
    %766 = vmatpush2.msra.mxu0 0.0
    %767 = vmatprep.subr.mxu0 0.0
    %768 = vmatpush2.msra.mxu0 0.0
    %769 = vmatprep.subr.mxu0 0.0
    %770 = vmatpush2.msra.mxu0 0.0
    %771 = vmatprep.subr.mxu0 0.0
    %772 = vmatpush2.msra.mxu0 0.0
    %773 = vmatprep.subr.mxu0 0.0
    %774 = vmatpush2.msra.mxu0 0.0
    %775 = vmatprep.subr.mxu0 0.0
    %776 = vmatpush2.msra.mxu0 0.0
    %777 = vmatprep.subr.mxu0 0.0
    %778 = vmatpush2.msra.mxu0 0.0
    %779 = vmatprep.subr.mxu0 0.0
    %780 = vmatpush2.msra.mxu0 0.0
    %781 = vmatprep.mubr.f32.mxu0 0.0
    %782 = vmatmul.mubr.f32.gmra.mxu0 %v715
    %v783 = vpop.f32.mrf.mxu0
    %v784 = vadd.f32 0.0, %v783
    %v785 = vpop.f32.mrf.mxu0
    %786 = vdwg.mxu0
    %v787 = vmul.f32 %v784, %v710
    %788 = vrot.lane.b32.xlu0 %v124, 80
    %v789 = vpop.permute.xlu0 %788
    %790 = vrot.lane.b32.xlu0 %v208, 80
    %v791 = vpop.permute.xlu0 %790
    %v792 = vsel %vm295, %v789, 0
    %v794 = vsel %vm295, %v791, 0
    %796 = vmatprep.subr.mxu0 0.0
    %797 = vmatpush1.xpose.msra.mxu0 0.0
    %798 = vmatprep.subr.mxu0 0.0
    %799 = vmatpush1.xpose.msra.mxu0 0.0
    %800 = vmatprep.subr.mxu0 0.0
    %801 = vmatpush1.xpose.msra.mxu0 0.0
    %802 = vmatprep.subr.mxu0 0.0
    %803 = vmatpush1.xpose.msra.mxu0 0.0
    %804 = vmatprep.subr.mxu0 0.0
    %805 = vmatpush1.xpose.msra.mxu0 0.0
    %806 = vmatprep.subr.mxu0 0.0
    %807 = vmatpush1.xpose.msra.mxu0 0.0
    %808 = vmatprep.subr.mxu0 0.0
    %809 = vmatpush1.xpose.msra.mxu0 0.0
    %810 = vmatprep.subr.mxu0 0.0
    %811 = vmatpush1.xpose.msra.mxu0 0.0
    %812 = vmatprep.subr.mxu0 0.0
    %813 = vmatpush1.xpose.msra.mxu0 0.0
    %814 = vmatprep.subr.mxu0 0.0
    %815 = vmatpush1.xpose.msra.mxu0 0.0
    %816 = vmatprep.subr.mxu0 0.0
    %817 = vmatpush1.xpose.msra.mxu0 0.0
    %818 = vmatprep.subr.mxu0 0.0
    %819 = vmatpush1.xpose.msra.mxu0 0.0
    %820 = vmatprep.subr.mxu0 0.0
    %821 = vmatpush1.xpose.msra.mxu0 0.0
    %822 = vmatprep.subr.mxu0 0.0
    %823 = vmatpush1.xpose.msra.mxu0 0.0
    %824 = vmatprep.subr.mxu0 0.0
    %825 = vmatpush1.xpose.msra.mxu0 0.0
    %826 = vmatprep.subr.mxu0 0.0
    %827 = vmatpush1.xpose.msra.mxu0 %v794
    %828 = vmatprep.subr.mxu0 0.0
    %829 = vmatpush2.xpose.msra.mxu0 0.0
    %830 = vmatprep.subr.mxu0 0.0
    %831 = vmatpush2.xpose.msra.mxu0 0.0
    %832 = vmatprep.subr.mxu0 0.0
    %833 = vmatpush2.xpose.msra.mxu0 0.0
    %834 = vmatprep.subr.mxu0 0.0
    %835 = vmatpush2.xpose.msra.mxu0 0.0
    %836 = vmatprep.subr.mxu0 0.0
    %837 = vmatpush2.xpose.msra.mxu0 0.0
    %838 = vmatprep.subr.mxu0 0.0
    %839 = vmatpush2.xpose.msra.mxu0 0.0
    %840 = vmatprep.subr.mxu0 0.0
    %841 = vmatpush2.xpose.msra.mxu0 0.0
    %842 = vmatprep.subr.mxu0 0.0
    %843 = vmatpush2.xpose.msra.mxu0 0.0
    %844 = vmatprep.subr.mxu0 0.0
    %845 = vmatpush2.xpose.msra.mxu0 0.0
    %846 = vmatprep.subr.mxu0 0.0
    %847 = vmatpush2.xpose.msra.mxu0 0.0
    %848 = vmatprep.subr.mxu0 0.0
    %849 = vmatpush2.xpose.msra.mxu0 0.0
    %850 = vmatprep.subr.mxu0 0.0
    %851 = vmatpush2.xpose.msra.mxu0 0.0
    %852 = vmatprep.subr.mxu0 0.0
    %853 = vmatpush2.xpose.msra.mxu0 0.0
    %854 = vmatprep.subr.mxu0 0.0
    %855 = vmatpush2.xpose.msra.mxu0 0.0
    %856 = vmatprep.subr.mxu0 0.0
    %857 = vmatpush2.xpose.msra.mxu0 0.0
    %858 = vmatprep.subr.mxu0 0.0
    %859 = vmatpush2.xpose.msra.mxu0 0.0
    %860 = vmatprep.mubr.f32.mxu0 0.0
    %861 = vmatmul.mubr.f32.gmra.mxu0 %v792
    %v862 = vpop.f32.mrf.mxu0
    %v863 = vadd.f32 0.0, %v862
    %v864 = vpop.f32.mrf.mxu0
    %865 = vdwg.mxu0
    %v866 = vsel %vm372, %v863, -inf
    %867 = vmax.xlane.f32.xlu0 %v866
    %v868 = vpop.xlane.xlu0 %867
    %v869 = vsub.f32 %v863, %v868
    %v870 = vmul.f32 %v869, 1.442695
    %v871 = vpow.pop %v870
    %v872 = vsel %vm372, %v871, 0.0
    %873 = vadd.xlane.f32.xlu0 %v872
    %v874 = vpop.xlane.xlu0 %873
    %v875 = vrcp.pop %v874
    %876 = vrot.lane.b32.xlu0 %v292, 80
    %v877 = vpop.permute.xlu0 %876
    %v880 = vsel %vm372, %v871, 0
    %882 = vmatprep.subr.mxu0 0.0
    %883 = vmatpush1.msra.mxu0 0.0
    %884 = vmatprep.subr.mxu0 0.0
    %885 = vmatpush1.msra.mxu0 0.0
    %886 = vmatprep.subr.mxu0 0.0
    %887 = vmatpush1.msra.mxu0 0.0
    %888 = vmatprep.subr.mxu0 0.0
    %889 = vmatpush1.msra.mxu0 0.0
    %890 = vmatprep.subr.mxu0 0.0
    %891 = vmatpush1.msra.mxu0 0.0
    %892 = vmatprep.subr.mxu0 0.0
    %893 = vmatpush1.msra.mxu0 0.0
    %894 = vmatprep.subr.mxu0 0.0
    %895 = vmatpush1.msra.mxu0 0.0
    %896 = vmatprep.subr.mxu0 0.0
    %897 = vmatpush1.msra.mxu0 0.0
    %898 = vmatprep.subr.mxu0 0.0
    %899 = vmatpush1.msra.mxu0 0.0
    %900 = vmatprep.subr.mxu0 0.0
    %901 = vmatpush1.msra.mxu0 0.0
    %902 = vmatprep.subr.mxu0 0.0
    %903 = vmatpush1.msra.mxu0 0.0
    %904 = vmatprep.subr.mxu0 0.0
    %905 = vmatpush1.msra.mxu0 0.0
    %906 = vmatprep.subr.mxu0 0.0
    %907 = vmatpush1.msra.mxu0 0.0
    %908 = vmatprep.subr.mxu0 0.0
    %909 = vmatpush1.msra.mxu0 0.0
    %910 = vmatprep.subr.mxu0 0.0
    %911 = vmatpush1.msra.mxu0 0.0
    %912 = vmatprep.subr.mxu0 0.0
    %913 = vmatpush1.msra.mxu0 %v877
    %914 = vmatprep.subr.mxu0 0.0
    %915 = vmatpush2.msra.mxu0 0.0
    %916 = vmatprep.subr.mxu0 0.0
    %917 = vmatpush2.msra.mxu0 0.0
    %918 = vmatprep.subr.mxu0 0.0
    %919 = vmatpush2.msra.mxu0 0.0
    %920 = vmatprep.subr.mxu0 0.0
    %921 = vmatpush2.msra.mxu0 0.0
    %922 = vmatprep.subr.mxu0 0.0
    %923 = vmatpush2.msra.mxu0 0.0
    %924 = vmatprep.subr.mxu0 0.0
    %925 = vmatpush2.msra.mxu0 0.0
    %926 = vmatprep.subr.mxu0 0.0
    %927 = vmatpush2.msra.mxu0 0.0
    %928 = vmatprep.subr.mxu0 0.0
    %929 = vmatpush2.msra.mxu0 0.0
    %930 = vmatprep.subr.mxu0 0.0
    %931 = vmatpush2.msra.mxu0 0.0
    %932 = vmatprep.subr.mxu0 0.0
    %933 = vmatpush2.msra.mxu0 0.0
    %934 = vmatprep.subr.mxu0 0.0
    %935 = vmatpush2.msra.mxu0 0.0
    %936 = vmatprep.subr.mxu0 0.0
    %937 = vmatpush2.msra.mxu0 0.0
    %938 = vmatprep.subr.mxu0 0.0
    %939 = vmatpush2.msra.mxu0 0.0
    %940 = vmatprep.subr.mxu0 0.0
    %941 = vmatpush2.msra.mxu0 0.0
    %942 = vmatprep.subr.mxu0 0.0
    %943 = vmatpush2.msra.mxu0 0.0
    %944 = vmatprep.subr.mxu0 0.0
    %945 = vmatpush2.msra.mxu0 0.0
    %946 = vmatprep.mubr.f32.mxu0 0.0
    %947 = vmatmul.mubr.f32.gmra.mxu0 %v880
    %v948 = vpop.f32.mrf.mxu0
    %v949 = vadd.f32 0.0, %v948
    %v950 = vpop.f32.mrf.mxu0
    %951 = vdwg.mxu0
    %v952 = vmul.f32 %v949, %v875
    %953 = vrot.lane.b32.xlu0 %v124, 64
    %v954 = vpop.permute.xlu0 %953
    %955 = vrot.lane.b32.xlu0 %v208, 64
    %v956 = vpop.permute.xlu0 %955
    %v957 = vsel %vm295, %v954, 0
    %v959 = vsel %vm295, %v956, 0
    %961 = vmatprep.subr.mxu0 0.0
    %962 = vmatpush1.xpose.msra.mxu0 0.0
    %963 = vmatprep.subr.mxu0 0.0
    %964 = vmatpush1.xpose.msra.mxu0 0.0
    %965 = vmatprep.subr.mxu0 0.0
    %966 = vmatpush1.xpose.msra.mxu0 0.0
    %967 = vmatprep.subr.mxu0 0.0
    %968 = vmatpush1.xpose.msra.mxu0 0.0
    %969 = vmatprep.subr.mxu0 0.0
    %970 = vmatpush1.xpose.msra.mxu0 0.0
    %971 = vmatprep.subr.mxu0 0.0
    %972 = vmatpush1.xpose.msra.mxu0 0.0
    %973 = vmatprep.subr.mxu0 0.0
    %974 = vmatpush1.xpose.msra.mxu0 0.0
    %975 = vmatprep.subr.mxu0 0.0
    %976 = vmatpush1.xpose.msra.mxu0 0.0
    %977 = vmatprep.subr.mxu0 0.0
    %978 = vmatpush1.xpose.msra.mxu0 0.0
    %979 = vmatprep.subr.mxu0 0.0
    %980 = vmatpush1.xpose.msra.mxu0 0.0
    %981 = vmatprep.subr.mxu0 0.0
    %982 = vmatpush1.xpose.msra.mxu0 0.0
    %983 = vmatprep.subr.mxu0 0.0
    %984 = vmatpush1.xpose.msra.mxu0 0.0
    %985 = vmatprep.subr.mxu0 0.0
    %986 = vmatpush1.xpose.msra.mxu0 0.0
    %987 = vmatprep.subr.mxu0 0.0
    %988 = vmatpush1.xpose.msra.mxu0 0.0
    %989 = vmatprep.subr.mxu0 0.0
    %990 = vmatpush1.xpose.msra.mxu0 0.0
    %991 = vmatprep.subr.mxu0 0.0
    %992 = vmatpush1.xpose.msra.mxu0 %v959
    %993 = vmatprep.subr.mxu0 0.0
    %994 = vmatpush2.xpose.msra.mxu0 0.0
    %995 = vmatprep.subr.mxu0 0.0
    %996 = vmatpush2.xpose.msra.mxu0 0.0
    %997 = vmatprep.subr.mxu0 0.0
    %998 = vmatpush2.xpose.msra.mxu0 0.0
    %999 = vmatprep.subr.mxu0 0.0
    %1000 = vmatpush2.xpose.msra.mxu0 0.0
    %1001 = vmatprep.subr.mxu0 0.0
    %1002 = vmatpush2.xpose.msra.mxu0 0.0
    %1003 = vmatprep.subr.mxu0 0.0
    %1004 = vmatpush2.xpose.msra.mxu0 0.0
    %1005 = vmatprep.subr.mxu0 0.0
    %1006 = vmatpush2.xpose.msra.mxu0 0.0
    %1007 = vmatprep.subr.mxu0 0.0
    %1008 = vmatpush2.xpose.msra.mxu0 0.0
    %1009 = vmatprep.subr.mxu0 0.0
    %1010 = vmatpush2.xpose.msra.mxu0 0.0
    %1011 = vmatprep.subr.mxu0 0.0
    %1012 = vmatpush2.xpose.msra.mxu0 0.0
    %1013 = vmatprep.subr.mxu0 0.0
    %1014 = vmatpush2.xpose.msra.mxu0 0.0
    %1015 = vmatprep.subr.mxu0 0.0
    %1016 = vmatpush2.xpose.msra.mxu0 0.0
    %1017 = vmatprep.subr.mxu0 0.0
    %1018 = vmatpush2.xpose.msra.mxu0 0.0
    %1019 = vmatprep.subr.mxu0 0.0
    %1020 = vmatpush2.xpose.msra.mxu0 0.0
    %1021 = vmatprep.subr.mxu0 0.0
    %1022 = vmatpush2.xpose.msra.mxu0 0.0
    %1023 = vmatprep.subr.mxu0 0.0
    %1024 = vmatpush2.xpose.msra.mxu0 0.0
    %1025 = vmatprep.mubr.f32.mxu0 0.0
    %1026 = vmatmul.mubr.f32.gmra.mxu0 %v957
    %v1027 = vpop.f32.mrf.mxu0
    %v1028 = vadd.f32 0.0, %v1027
    %v1029 = vpop.f32.mrf.mxu0
    %1030 = vdwg.mxu0
    %v1031 = vsel %vm372, %v1028, -inf
    %1032 = vmax.xlane.f32.xlu0 %v1031
    %v1033 = vpop.xlane.xlu0 %1032
    %v1034 = vsub.f32 %v1028, %v1033
    %v1035 = vmul.f32 %v1034, 1.442695
    %v1036 = vpow.pop %v1035
    %v1037 = vsel %vm372, %v1036, 0.0
    %1038 = vadd.xlane.f32.xlu0 %v1037
    %v1039 = vpop.xlane.xlu0 %1038
    %v1040 = vrcp.pop %v1039
    %1041 = vrot.lane.b32.xlu0 %v292, 64
    %v1042 = vpop.permute.xlu0 %1041
    %v1045 = vsel %vm372, %v1036, 0
    %1047 = vmatprep.subr.mxu0 0.0
    %1048 = vmatpush1.msra.mxu0 0.0
    %1049 = vmatprep.subr.mxu0 0.0
    %1050 = vmatpush1.msra.mxu0 0.0
    %1051 = vmatprep.subr.mxu0 0.0
    %1052 = vmatpush1.msra.mxu0 0.0
    %1053 = vmatprep.subr.mxu0 0.0
    %1054 = vmatpush1.msra.mxu0 0.0
    %1055 = vmatprep.subr.mxu0 0.0
    %1056 = vmatpush1.msra.mxu0 0.0
    %1057 = vmatprep.subr.mxu0 0.0
    %1058 = vmatpush1.msra.mxu0 0.0
    %1059 = vmatprep.subr.mxu0 0.0
    %1060 = vmatpush1.msra.mxu0 0.0
    %1061 = vmatprep.subr.mxu0 0.0
    %1062 = vmatpush1.msra.mxu0 0.0
    %1063 = vmatprep.subr.mxu0 0.0
    %1064 = vmatpush1.msra.mxu0 0.0
    %1065 = vmatprep.subr.mxu0 0.0
    %1066 = vmatpush1.msra.mxu0 0.0
    %1067 = vmatprep.subr.mxu0 0.0
    %1068 = vmatpush1.msra.mxu0 0.0
    %1069 = vmatprep.subr.mxu0 0.0
    %1070 = vmatpush1.msra.mxu0 0.0
    %1071 = vmatprep.subr.mxu0 0.0
    %1072 = vmatpush1.msra.mxu0 0.0
    %1073 = vmatprep.subr.mxu0 0.0
    %1074 = vmatpush1.msra.mxu0 0.0
    %1075 = vmatprep.subr.mxu0 0.0
    %1076 = vmatpush1.msra.mxu0 0.0
    %1077 = vmatprep.subr.mxu0 0.0
    %1078 = vmatpush1.msra.mxu0 %v1042
    %1079 = vmatprep.subr.mxu0 0.0
    %1080 = vmatpush2.msra.mxu0 0.0
    %1081 = vmatprep.subr.mxu0 0.0
    %1082 = vmatpush2.msra.mxu0 0.0
    %1083 = vmatprep.subr.mxu0 0.0
    %1084 = vmatpush2.msra.mxu0 0.0
    %1085 = vmatprep.subr.mxu0 0.0
    %1086 = vmatpush2.msra.mxu0 0.0
    %1087 = vmatprep.subr.mxu0 0.0
    %1088 = vmatpush2.msra.mxu0 0.0
    %1089 = vmatprep.subr.mxu0 0.0
    %1090 = vmatpush2.msra.mxu0 0.0
    %1091 = vmatprep.subr.mxu0 0.0
    %1092 = vmatpush2.msra.mxu0 0.0
    %1093 = vmatprep.subr.mxu0 0.0
    %1094 = vmatpush2.msra.mxu0 0.0
    %1095 = vmatprep.subr.mxu0 0.0
    %1096 = vmatpush2.msra.mxu0 0.0
    %1097 = vmatprep.subr.mxu0 0.0
    %1098 = vmatpush2.msra.mxu0 0.0
    %1099 = vmatprep.subr.mxu0 0.0
    %1100 = vmatpush2.msra.mxu0 0.0
    %1101 = vmatprep.subr.mxu0 0.0
    %1102 = vmatpush2.msra.mxu0 0.0
    %1103 = vmatprep.subr.mxu0 0.0
    %1104 = vmatpush2.msra.mxu0 0.0
    %1105 = vmatprep.subr.mxu0 0.0
    %1106 = vmatpush2.msra.mxu0 0.0
    %1107 = vmatprep.subr.mxu0 0.0
    %1108 = vmatpush2.msra.mxu0 0.0
    %1109 = vmatprep.subr.mxu0 0.0
    %1110 = vmatpush2.msra.mxu0 0.0
    %1111 = vmatprep.mubr.f32.mxu0 0.0
    %1112 = vmatmul.mubr.f32.gmra.mxu0 %v1045
    %v1113 = vpop.f32.mrf.mxu0
    %v1114 = vadd.f32 0.0, %v1113
    %v1115 = vpop.f32.mrf.mxu0
    %1116 = vdwg.mxu0
    %v1117 = vmul.f32 %v1114, %v1040
    %1118 = vrot.lane.b32.xlu0 %v124, 48
    %v1119 = vpop.permute.xlu0 %1118
    %1120 = vrot.lane.b32.xlu0 %v208, 48
    %v1121 = vpop.permute.xlu0 %1120
    %v1122 = vsel %vm295, %v1119, 0
    %v1124 = vsel %vm295, %v1121, 0
    %1126 = vmatprep.subr.mxu0 0.0
    %1127 = vmatpush1.xpose.msra.mxu0 0.0
    %1128 = vmatprep.subr.mxu0 0.0
    %1129 = vmatpush1.xpose.msra.mxu0 0.0
    %1130 = vmatprep.subr.mxu0 0.0
    %1131 = vmatpush1.xpose.msra.mxu0 0.0
    %1132 = vmatprep.subr.mxu0 0.0
    %1133 = vmatpush1.xpose.msra.mxu0 0.0
    %1134 = vmatprep.subr.mxu0 0.0
    %1135 = vmatpush1.xpose.msra.mxu0 0.0
    %1136 = vmatprep.subr.mxu0 0.0
    %1137 = vmatpush1.xpose.msra.mxu0 0.0
    %1138 = vmatprep.subr.mxu0 0.0
    %1139 = vmatpush1.xpose.msra.mxu0 0.0
    %1140 = vmatprep.subr.mxu0 0.0
    %1141 = vmatpush1.xpose.msra.mxu0 0.0
    %1142 = vmatprep.subr.mxu0 0.0
    %1143 = vmatpush1.xpose.msra.mxu0 0.0
    %1144 = vmatprep.subr.mxu0 0.0
    %1145 = vmatpush1.xpose.msra.mxu0 0.0
    %1146 = vmatprep.subr.mxu0 0.0
    %1147 = vmatpush1.xpose.msra.mxu0 0.0
    %1148 = vmatprep.subr.mxu0 0.0
    %1149 = vmatpush1.xpose.msra.mxu0 0.0
    %1150 = vmatprep.subr.mxu0 0.0
    %1151 = vmatpush1.xpose.msra.mxu0 0.0
    %1152 = vmatprep.subr.mxu0 0.0
    %1153 = vmatpush1.xpose.msra.mxu0 0.0
    %1154 = vmatprep.subr.mxu0 0.0
    %1155 = vmatpush1.xpose.msra.mxu0 0.0
    %1156 = vmatprep.subr.mxu0 0.0
    %1157 = vmatpush1.xpose.msra.mxu0 %v1124
    %1158 = vmatprep.subr.mxu0 0.0
    %1159 = vmatpush2.xpose.msra.mxu0 0.0
    %1160 = vmatprep.subr.mxu0 0.0
    %1161 = vmatpush2.xpose.msra.mxu0 0.0
    %1162 = vmatprep.subr.mxu0 0.0
    %1163 = vmatpush2.xpose.msra.mxu0 0.0
    %1164 = vmatprep.subr.mxu0 0.0
    %1165 = vmatpush2.xpose.msra.mxu0 0.0
    %1166 = vmatprep.subr.mxu0 0.0
    %1167 = vmatpush2.xpose.msra.mxu0 0.0
    %1168 = vmatprep.subr.mxu0 0.0
    %1169 = vmatpush2.xpose.msra.mxu0 0.0
    %1170 = vmatprep.subr.mxu0 0.0
    %1171 = vmatpush2.xpose.msra.mxu0 0.0
    %1172 = vmatprep.subr.mxu0 0.0
    %1173 = vmatpush2.xpose.msra.mxu0 0.0
    %1174 = vmatprep.subr.mxu0 0.0
    %1175 = vmatpush2.xpose.msra.mxu0 0.0
    %1176 = vmatprep.subr.mxu0 0.0
    %1177 = vmatpush2.xpose.msra.mxu0 0.0
    %1178 = vmatprep.subr.mxu0 0.0
    %1179 = vmatpush2.xpose.msra.mxu0 0.0
    %1180 = vmatprep.subr.mxu0 0.0
    %1181 = vmatpush2.xpose.msra.mxu0 0.0
    %1182 = vmatprep.subr.mxu0 0.0
    %1183 = vmatpush2.xpose.msra.mxu0 0.0
    %1184 = vmatprep.subr.mxu0 0.0
    %1185 = vmatpush2.xpose.msra.mxu0 0.0
    %1186 = vmatprep.subr.mxu0 0.0
    %1187 = vmatpush2.xpose.msra.mxu0 0.0
    %1188 = vmatprep.subr.mxu0 0.0
    %1189 = vmatpush2.xpose.msra.mxu0 0.0
    %1190 = vmatprep.mubr.f32.mxu0 0.0
    %1191 = vmatmul.mubr.f32.gmra.mxu0 %v1122
    %v1192 = vpop.f32.mrf.mxu0
    %v1193 = vadd.f32 0.0, %v1192
    %v1194 = vpop.f32.mrf.mxu0
    %1195 = vdwg.mxu0
    %v1196 = vsel %vm372, %v1193, -inf
    %1197 = vmax.xlane.f32.xlu0 %v1196
    %v1198 = vpop.xlane.xlu0 %1197
    %v1199 = vsub.f32 %v1193, %v1198
    %v1200 = vmul.f32 %v1199, 1.442695
    %v1201 = vpow.pop %v1200
    %v1202 = vsel %vm372, %v1201, 0.0
    %1203 = vadd.xlane.f32.xlu0 %v1202
    %v1204 = vpop.xlane.xlu0 %1203
    %v1205 = vrcp.pop %v1204
    %1206 = vrot.lane.b32.xlu0 %v292, 48
    %v1207 = vpop.permute.xlu0 %1206
    %v1210 = vsel %vm372, %v1201, 0
    %1212 = vmatprep.subr.mxu0 0.0
    %1213 = vmatpush1.msra.mxu0 0.0
    %1214 = vmatprep.subr.mxu0 0.0
    %1215 = vmatpush1.msra.mxu0 0.0
    %1216 = vmatprep.subr.mxu0 0.0
    %1217 = vmatpush1.msra.mxu0 0.0
    %1218 = vmatprep.subr.mxu0 0.0
    %1219 = vmatpush1.msra.mxu0 0.0
    %1220 = vmatprep.subr.mxu0 0.0
    %1221 = vmatpush1.msra.mxu0 0.0
    %1222 = vmatprep.subr.mxu0 0.0
    %1223 = vmatpush1.msra.mxu0 0.0
    %1224 = vmatprep.subr.mxu0 0.0
    %1225 = vmatpush1.msra.mxu0 0.0
    %1226 = vmatprep.subr.mxu0 0.0
    %1227 = vmatpush1.msra.mxu0 0.0
    %1228 = vmatprep.subr.mxu0 0.0
    %1229 = vmatpush1.msra.mxu0 0.0
    %1230 = vmatprep.subr.mxu0 0.0
    %1231 = vmatpush1.msra.mxu0 0.0
    %1232 = vmatprep.subr.mxu0 0.0
    %1233 = vmatpush1.msra.mxu0 0.0
    %1234 = vmatprep.subr.mxu0 0.0
    %1235 = vmatpush1.msra.mxu0 0.0
    %1236 = vmatprep.subr.mxu0 0.0
    %1237 = vmatpush1.msra.mxu0 0.0
    %1238 = vmatprep.subr.mxu0 0.0
    %1239 = vmatpush1.msra.mxu0 0.0
    %1240 = vmatprep.subr.mxu0 0.0
    %1241 = vmatpush1.msra.mxu0 0.0
    %1242 = vmatprep.subr.mxu0 0.0
    %1243 = vmatpush1.msra.mxu0 %v1207
    %1244 = vmatprep.subr.mxu0 0.0
    %1245 = vmatpush2.msra.mxu0 0.0
    %1246 = vmatprep.subr.mxu0 0.0
    %1247 = vmatpush2.msra.mxu0 0.0
    %1248 = vmatprep.subr.mxu0 0.0
    %1249 = vmatpush2.msra.mxu0 0.0
    %1250 = vmatprep.subr.mxu0 0.0
    %1251 = vmatpush2.msra.mxu0 0.0
    %1252 = vmatprep.subr.mxu0 0.0
    %1253 = vmatpush2.msra.mxu0 0.0
    %1254 = vmatprep.subr.mxu0 0.0
    %1255 = vmatpush2.msra.mxu0 0.0
    %1256 = vmatprep.subr.mxu0 0.0
    %1257 = vmatpush2.msra.mxu0 0.0
    %1258 = vmatprep.subr.mxu0 0.0
    %1259 = vmatpush2.msra.mxu0 0.0
    %1260 = vmatprep.subr.mxu0 0.0
    %1261 = vmatpush2.msra.mxu0 0.0
    %1262 = vmatprep.subr.mxu0 0.0
    %1263 = vmatpush2.msra.mxu0 0.0
    %1264 = vmatprep.subr.mxu0 0.0
    %1265 = vmatpush2.msra.mxu0 0.0
    %1266 = vmatprep.subr.mxu0 0.0
    %1267 = vmatpush2.msra.mxu0 0.0
    %1268 = vmatprep.subr.mxu0 0.0
    %1269 = vmatpush2.msra.mxu0 0.0
    %1270 = vmatprep.subr.mxu0 0.0
    %1271 = vmatpush2.msra.mxu0 0.0
    %1272 = vmatprep.subr.mxu0 0.0
    %1273 = vmatpush2.msra.mxu0 0.0
    %1274 = vmatprep.subr.mxu0 0.0
    %1275 = vmatpush2.msra.mxu0 0.0
    %1276 = vmatprep.mubr.f32.mxu0 0.0
    %1277 = vmatmul.mubr.f32.gmra.mxu0 %v1210
    %v1278 = vpop.f32.mrf.mxu0
    %v1279 = vadd.f32 0.0, %v1278
    %v1280 = vpop.f32.mrf.mxu0
    %1281 = vdwg.mxu0
    %v1282 = vmul.f32 %v1279, %v1205
    %1283 = vrot.lane.b32.xlu0 %v124, 32
    %v1284 = vpop.permute.xlu0 %1283
    %1285 = vrot.lane.b32.xlu0 %v208, 32
    %v1286 = vpop.permute.xlu0 %1285
    %v1287 = vsel %vm295, %v1284, 0
    %v1289 = vsel %vm295, %v1286, 0
    %1291 = vmatprep.subr.mxu0 0.0
    %1292 = vmatpush1.xpose.msra.mxu0 0.0
    %1293 = vmatprep.subr.mxu0 0.0
    %1294 = vmatpush1.xpose.msra.mxu0 0.0
    %1295 = vmatprep.subr.mxu0 0.0
    %1296 = vmatpush1.xpose.msra.mxu0 0.0
    %1297 = vmatprep.subr.mxu0 0.0
    %1298 = vmatpush1.xpose.msra.mxu0 0.0
    %1299 = vmatprep.subr.mxu0 0.0
    %1300 = vmatpush1.xpose.msra.mxu0 0.0
    %1301 = vmatprep.subr.mxu0 0.0
    %1302 = vmatpush1.xpose.msra.mxu0 0.0
    %1303 = vmatprep.subr.mxu0 0.0
    %1304 = vmatpush1.xpose.msra.mxu0 0.0
    %1305 = vmatprep.subr.mxu0 0.0
    %1306 = vmatpush1.xpose.msra.mxu0 0.0
    %1307 = vmatprep.subr.mxu0 0.0
    %1308 = vmatpush1.xpose.msra.mxu0 0.0
    %1309 = vmatprep.subr.mxu0 0.0
    %1310 = vmatpush1.xpose.msra.mxu0 0.0
    %1311 = vmatprep.subr.mxu0 0.0
    %1312 = vmatpush1.xpose.msra.mxu0 0.0
    %1313 = vmatprep.subr.mxu0 0.0
    %1314 = vmatpush1.xpose.msra.mxu0 0.0
    %1315 = vmatprep.subr.mxu0 0.0
    %1316 = vmatpush1.xpose.msra.mxu0 0.0
    %1317 = vmatprep.subr.mxu0 0.0
    %1318 = vmatpush1.xpose.msra.mxu0 0.0
    %1319 = vmatprep.subr.mxu0 0.0
    %1320 = vmatpush1.xpose.msra.mxu0 0.0
    %1321 = vmatprep.subr.mxu0 0.0
    %1322 = vmatpush1.xpose.msra.mxu0 %v1289
    %1323 = vmatprep.subr.mxu0 0.0
    %1324 = vmatpush2.xpose.msra.mxu0 0.0
    %1325 = vmatprep.subr.mxu0 0.0
    %1326 = vmatpush2.xpose.msra.mxu0 0.0
    %1327 = vmatprep.subr.mxu0 0.0
    %1328 = vmatpush2.xpose.msra.mxu0 0.0
    %1329 = vmatprep.subr.mxu0 0.0
    %1330 = vmatpush2.xpose.msra.mxu0 0.0
    %1331 = vmatprep.subr.mxu0 0.0
    %1332 = vmatpush2.xpose.msra.mxu0 0.0
    %1333 = vmatprep.subr.mxu0 0.0
    %1334 = vmatpush2.xpose.msra.mxu0 0.0
    %1335 = vmatprep.subr.mxu0 0.0
    %1336 = vmatpush2.xpose.msra.mxu0 0.0
    %1337 = vmatprep.subr.mxu0 0.0
    %1338 = vmatpush2.xpose.msra.mxu0 0.0
    %1339 = vmatprep.subr.mxu0 0.0
    %1340 = vmatpush2.xpose.msra.mxu0 0.0
    %1341 = vmatprep.subr.mxu0 0.0
    %1342 = vmatpush2.xpose.msra.mxu0 0.0
    %1343 = vmatprep.subr.mxu0 0.0
    %1344 = vmatpush2.xpose.msra.mxu0 0.0
    %1345 = vmatprep.subr.mxu0 0.0
    %1346 = vmatpush2.xpose.msra.mxu0 0.0
    %1347 = vmatprep.subr.mxu0 0.0
    %1348 = vmatpush2.xpose.msra.mxu0 0.0
    %1349 = vmatprep.subr.mxu0 0.0
    %1350 = vmatpush2.xpose.msra.mxu0 0.0
    %1351 = vmatprep.subr.mxu0 0.0
    %1352 = vmatpush2.xpose.msra.mxu0 0.0
    %1353 = vmatprep.subr.mxu0 0.0
    %1354 = vmatpush2.xpose.msra.mxu0 0.0
    %1355 = vmatprep.mubr.f32.mxu0 0.0
    %1356 = vmatmul.mubr.f32.gmra.mxu0 %v1287
    %v1357 = vpop.f32.mrf.mxu0
    %v1358 = vadd.f32 0.0, %v1357
    %v1359 = vpop.f32.mrf.mxu0
    %1360 = vdwg.mxu0
    %v1361 = vsel %vm372, %v1358, -inf
    %1362 = vmax.xlane.f32.xlu0 %v1361
    %v1363 = vpop.xlane.xlu0 %1362
    %v1364 = vsub.f32 %v1358, %v1363
    %v1365 = vmul.f32 %v1364, 1.442695
    %v1366 = vpow.pop %v1365
    %v1367 = vsel %vm372, %v1366, 0.0
    %1368 = vadd.xlane.f32.xlu0 %v1367
    %v1369 = vpop.xlane.xlu0 %1368
    %v1370 = vrcp.pop %v1369
    %1371 = vrot.lane.b32.xlu0 %v292, 32
    %v1372 = vpop.permute.xlu0 %1371
    %v1375 = vsel %vm372, %v1366, 0
    %1377 = vmatprep.subr.mxu0 0.0
    %1378 = vmatpush1.msra.mxu0 0.0
    %1379 = vmatprep.subr.mxu0 0.0
    %1380 = vmatpush1.msra.mxu0 0.0
    %1381 = vmatprep.subr.mxu0 0.0
    %1382 = vmatpush1.msra.mxu0 0.0
    %1383 = vmatprep.subr.mxu0 0.0
    %1384 = vmatpush1.msra.mxu0 0.0
    %1385 = vmatprep.subr.mxu0 0.0
    %1386 = vmatpush1.msra.mxu0 0.0
    %1387 = vmatprep.subr.mxu0 0.0
    %1388 = vmatpush1.msra.mxu0 0.0
    %1389 = vmatprep.subr.mxu0 0.0
    %1390 = vmatpush1.msra.mxu0 0.0
    %1391 = vmatprep.subr.mxu0 0.0
    %1392 = vmatpush1.msra.mxu0 0.0
    %1393 = vmatprep.subr.mxu0 0.0
    %1394 = vmatpush1.msra.mxu0 0.0
    %1395 = vmatprep.subr.mxu0 0.0
    %1396 = vmatpush1.msra.mxu0 0.0
    %1397 = vmatprep.subr.mxu0 0.0
    %1398 = vmatpush1.msra.mxu0 0.0
    %1399 = vmatprep.subr.mxu0 0.0
    %1400 = vmatpush1.msra.mxu0 0.0
    %1401 = vmatprep.subr.mxu0 0.0
    %1402 = vmatpush1.msra.mxu0 0.0
    %1403 = vmatprep.subr.mxu0 0.0
    %1404 = vmatpush1.msra.mxu0 0.0
    %1405 = vmatprep.subr.mxu0 0.0
    %1406 = vmatpush1.msra.mxu0 0.0
    %1407 = vmatprep.subr.mxu0 0.0
    %1408 = vmatpush1.msra.mxu0 %v1372
    %1409 = vmatprep.subr.mxu0 0.0
    %1410 = vmatpush2.msra.mxu0 0.0
    %1411 = vmatprep.subr.mxu0 0.0
    %1412 = vmatpush2.msra.mxu0 0.0
    %1413 = vmatprep.subr.mxu0 0.0
    %1414 = vmatpush2.msra.mxu0 0.0
    %1415 = vmatprep.subr.mxu0 0.0
    %1416 = vmatpush2.msra.mxu0 0.0
    %1417 = vmatprep.subr.mxu0 0.0
    %1418 = vmatpush2.msra.mxu0 0.0
    %1419 = vmatprep.subr.mxu0 0.0
    %1420 = vmatpush2.msra.mxu0 0.0
    %1421 = vmatprep.subr.mxu0 0.0
    %1422 = vmatpush2.msra.mxu0 0.0
    %1423 = vmatprep.subr.mxu0 0.0
    %1424 = vmatpush2.msra.mxu0 0.0
    %1425 = vmatprep.subr.mxu0 0.0
    %1426 = vmatpush2.msra.mxu0 0.0
    %1427 = vmatprep.subr.mxu0 0.0
    %1428 = vmatpush2.msra.mxu0 0.0
    %1429 = vmatprep.subr.mxu0 0.0
    %1430 = vmatpush2.msra.mxu0 0.0
    %1431 = vmatprep.subr.mxu0 0.0
    %1432 = vmatpush2.msra.mxu0 0.0
    %1433 = vmatprep.subr.mxu0 0.0
    %1434 = vmatpush2.msra.mxu0 0.0
    %1435 = vmatprep.subr.mxu0 0.0
    %1436 = vmatpush2.msra.mxu0 0.0
    %1437 = vmatprep.subr.mxu0 0.0
    %1438 = vmatpush2.msra.mxu0 0.0
    %1439 = vmatprep.subr.mxu0 0.0
    %1440 = vmatpush2.msra.mxu0 0.0
    %1441 = vmatprep.mubr.f32.mxu0 0.0
    %1442 = vmatmul.mubr.f32.gmra.mxu0 %v1375
    %v1443 = vpop.f32.mrf.mxu0
    %v1444 = vadd.f32 0.0, %v1443
    %v1445 = vpop.f32.mrf.mxu0
    %1446 = vdwg.mxu0
    %v1447 = vmul.f32 %v1444, %v1370
    %1448 = vrot.lane.b32.xlu0 %v124, 16
    %v1449 = vpop.permute.xlu0 %1448
    %1450 = vrot.lane.b32.xlu0 %v208, 16
    %v1451 = vpop.permute.xlu0 %1450
    %v1452 = vsel %vm295, %v1449, 0
    %v1454 = vsel %vm295, %v1451, 0
    %1456 = vmatprep.subr.mxu0 0.0
    %1457 = vmatpush1.xpose.msra.mxu0 0.0
    %1458 = vmatprep.subr.mxu0 0.0
    %1459 = vmatpush1.xpose.msra.mxu0 0.0
    %1460 = vmatprep.subr.mxu0 0.0
    %1461 = vmatpush1.xpose.msra.mxu0 0.0
    %1462 = vmatprep.subr.mxu0 0.0
    %1463 = vmatpush1.xpose.msra.mxu0 0.0
    %1464 = vmatprep.subr.mxu0 0.0
    %1465 = vmatpush1.xpose.msra.mxu0 0.0
    %1466 = vmatprep.subr.mxu0 0.0
    %1467 = vmatpush1.xpose.msra.mxu0 0.0
    %1468 = vmatprep.subr.mxu0 0.0
    %1469 = vmatpush1.xpose.msra.mxu0 0.0
    %1470 = vmatprep.subr.mxu0 0.0
    %1471 = vmatpush1.xpose.msra.mxu0 0.0
    %1472 = vmatprep.subr.mxu0 0.0
    %1473 = vmatpush1.xpose.msra.mxu0 0.0
    %1474 = vmatprep.subr.mxu0 0.0
    %1475 = vmatpush1.xpose.msra.mxu0 0.0
    %1476 = vmatprep.subr.mxu0 0.0
    %1477 = vmatpush1.xpose.msra.mxu0 0.0
    %1478 = vmatprep.subr.mxu0 0.0
    %1479 = vmatpush1.xpose.msra.mxu0 0.0
    %1480 = vmatprep.subr.mxu0 0.0
    %1481 = vmatpush1.xpose.msra.mxu0 0.0
    %1482 = vmatprep.subr.mxu0 0.0
    %1483 = vmatpush1.xpose.msra.mxu0 0.0
    %1484 = vmatprep.subr.mxu0 0.0
    %1485 = vmatpush1.xpose.msra.mxu0 0.0
    %1486 = vmatprep.subr.mxu0 0.0
    %1487 = vmatpush1.xpose.msra.mxu0 %v1454
    %1488 = vmatprep.subr.mxu0 0.0
    %1489 = vmatpush2.xpose.msra.mxu0 0.0
    %1490 = vmatprep.subr.mxu0 0.0
    %1491 = vmatpush2.xpose.msra.mxu0 0.0
    %1492 = vmatprep.subr.mxu0 0.0
    %1493 = vmatpush2.xpose.msra.mxu0 0.0
    %1494 = vmatprep.subr.mxu0 0.0
    %1495 = vmatpush2.xpose.msra.mxu0 0.0
    %1496 = vmatprep.subr.mxu0 0.0
    %1497 = vmatpush2.xpose.msra.mxu0 0.0
    %1498 = vmatprep.subr.mxu0 0.0
    %1499 = vmatpush2.xpose.msra.mxu0 0.0
    %1500 = vmatprep.subr.mxu0 0.0
    %1501 = vmatpush2.xpose.msra.mxu0 0.0
    %1502 = vmatprep.subr.mxu0 0.0
    %1503 = vmatpush2.xpose.msra.mxu0 0.0
    %1504 = vmatprep.subr.mxu0 0.0
    %1505 = vmatpush2.xpose.msra.mxu0 0.0
    %1506 = vmatprep.subr.mxu0 0.0
    %1507 = vmatpush2.xpose.msra.mxu0 0.0
    %1508 = vmatprep.subr.mxu0 0.0
    %1509 = vmatpush2.xpose.msra.mxu0 0.0
    %1510 = vmatprep.subr.mxu0 0.0
    %1511 = vmatpush2.xpose.msra.mxu0 0.0
    %1512 = vmatprep.subr.mxu0 0.0
    %1513 = vmatpush2.xpose.msra.mxu0 0.0
    %1514 = vmatprep.subr.mxu0 0.0
    %1515 = vmatpush2.xpose.msra.mxu0 0.0
    %1516 = vmatprep.subr.mxu0 0.0
    %1517 = vmatpush2.xpose.msra.mxu0 0.0
    %1518 = vmatprep.subr.mxu0 0.0
    %1519 = vmatpush2.xpose.msra.mxu0 0.0
    %1520 = vmatprep.mubr.f32.mxu0 0.0
    %1521 = vmatmul.mubr.f32.gmra.mxu0 %v1452
    %v1522 = vpop.f32.mrf.mxu0
    %v1523 = vadd.f32 0.0, %v1522
    %v1524 = vpop.f32.mrf.mxu0
    %1525 = vdwg.mxu0
    %v1526 = vsel %vm372, %v1523, -inf
    %1527 = vmax.xlane.f32.xlu0 %v1526
    %v1528 = vpop.xlane.xlu0 %1527
    %v1529 = vsub.f32 %v1523, %v1528
    %v1530 = vmul.f32 %v1529, 1.442695
    %v1531 = vpow.pop %v1530
    %v1532 = vsel %vm372, %v1531, 0.0
    %1533 = vadd.xlane.f32.xlu0 %v1532
    %v1534 = vpop.xlane.xlu0 %1533
    %v1535 = vrcp.pop %v1534
    %1536 = vrot.lane.b32.xlu0 %v292, 16
    %v1537 = vpop.permute.xlu0 %1536
    %v1540 = vsel %vm372, %v1531, 0
    %1542 = vmatprep.subr.mxu0 0.0
    %1543 = vmatpush1.msra.mxu0 0.0
    %1544 = vmatprep.subr.mxu0 0.0
    %1545 = vmatpush1.msra.mxu0 0.0
    %1546 = vmatprep.subr.mxu0 0.0
    %1547 = vmatpush1.msra.mxu0 0.0
    %1548 = vmatprep.subr.mxu0 0.0
    %1549 = vmatpush1.msra.mxu0 0.0
    %1550 = vmatprep.subr.mxu0 0.0
    %1551 = vmatpush1.msra.mxu0 0.0
    %1552 = vmatprep.subr.mxu0 0.0
    %1553 = vmatpush1.msra.mxu0 0.0
    %1554 = vmatprep.subr.mxu0 0.0
    %1555 = vmatpush1.msra.mxu0 0.0
    %1556 = vmatprep.subr.mxu0 0.0
    %1557 = vmatpush1.msra.mxu0 0.0
    %1558 = vmatprep.subr.mxu0 0.0
    %1559 = vmatpush1.msra.mxu0 0.0
    %1560 = vmatprep.subr.mxu0 0.0
    %1561 = vmatpush1.msra.mxu0 0.0
    %1562 = vmatprep.subr.mxu0 0.0
    %1563 = vmatpush1.msra.mxu0 0.0
    %1564 = vmatprep.subr.mxu0 0.0
    %1565 = vmatpush1.msra.mxu0 0.0
    %1566 = vmatprep.subr.mxu0 0.0
    %1567 = vmatpush1.msra.mxu0 0.0
    %1568 = vmatprep.subr.mxu0 0.0
    %1569 = vmatpush1.msra.mxu0 0.0
    %1570 = vmatprep.subr.mxu0 0.0
    %1571 = vmatpush1.msra.mxu0 0.0
    %1572 = vmatprep.subr.mxu0 0.0
    %1573 = vmatpush1.msra.mxu0 %v1537
    %1574 = vmatprep.subr.mxu0 0.0
    %1575 = vmatpush2.msra.mxu0 0.0
    %1576 = vmatprep.subr.mxu0 0.0
    %1577 = vmatpush2.msra.mxu0 0.0
    %1578 = vmatprep.subr.mxu0 0.0
    %1579 = vmatpush2.msra.mxu0 0.0
    %1580 = vmatprep.subr.mxu0 0.0
    %1581 = vmatpush2.msra.mxu0 0.0
    %1582 = vmatprep.subr.mxu0 0.0
    %1583 = vmatpush2.msra.mxu0 0.0
    %1584 = vmatprep.subr.mxu0 0.0
    %1585 = vmatpush2.msra.mxu0 0.0
    %1586 = vmatprep.subr.mxu0 0.0
    %1587 = vmatpush2.msra.mxu0 0.0
    %1588 = vmatprep.subr.mxu0 0.0
    %1589 = vmatpush2.msra.mxu0 0.0
    %1590 = vmatprep.subr.mxu0 0.0
    %1591 = vmatpush2.msra.mxu0 0.0
    %1592 = vmatprep.subr.mxu0 0.0
    %1593 = vmatpush2.msra.mxu0 0.0
    %1594 = vmatprep.subr.mxu0 0.0
    %1595 = vmatpush2.msra.mxu0 0.0
    %1596 = vmatprep.subr.mxu0 0.0
    %1597 = vmatpush2.msra.mxu0 0.0
    %1598 = vmatprep.subr.mxu0 0.0
    %1599 = vmatpush2.msra.mxu0 0.0
    %1600 = vmatprep.subr.mxu0 0.0
    %1601 = vmatpush2.msra.mxu0 0.0
    %1602 = vmatprep.subr.mxu0 0.0
    %1603 = vmatpush2.msra.mxu0 0.0
    %1604 = vmatprep.subr.mxu0 0.0
    %1605 = vmatpush2.msra.mxu0 0.0
    %1606 = vmatprep.mubr.f32.mxu0 0.0
    %1607 = vmatmul.mubr.f32.gmra.mxu0 %v1540
    %v1608 = vpop.f32.mrf.mxu0
    %v1609 = vadd.f32 0.0, %v1608
    %v1610 = vpop.f32.mrf.mxu0
    %1611 = vdwg.mxu0
    %v1612 = vmul.f32 %v1609, %v1535
    %1614 = vrot.lane.b32.xlu0 %v622, 16
    %v1615 = vpop.permute.xlu0 %1614
    %1618 = vrot.lane.b32.xlu0 %v787, 32
    %v1619 = vpop.permute.xlu0 %1618
    %1622 = vrot.lane.b32.xlu0 %v952, 48
    %v1623 = vpop.permute.xlu0 %1622
    %1626 = vrot.lane.b32.xlu0 %v1117, 64
    %v1627 = vpop.permute.xlu0 %1626
    %1630 = vrot.lane.b32.xlu0 %v1282, 80
    %v1631 = vpop.permute.xlu0 %1630
    %1634 = vrot.lane.b32.xlu0 %v1447, 96
    %v1635 = vpop.permute.xlu0 %1634
    %1638 = vrot.lane.b32.xlu0 %v1612, 112
    %v1639 = vpop.permute.xlu0 %1638
    %v1641 = vsel %vm295, %v456, %v1615
    %v1642 = vsel %vm53, %v1641, %v1619
    %vm1643 = vcmask 392192
    %v1644 = vsel %vm1643, %v1642, %v1623
    %vm1645 = vcmask 523264
    %v1646 = vsel %vm1645, %v1644, %v1627
    %vm1647 = vcmask 654336
    %v1648 = vsel %vm1647, %v1646, %v1631
    %vm1649 = vcmask 785408
    %v1650 = vsel %vm1649, %v1648, %v1635
    %vm1651 = vcmask 916480
    %v1652 = vsel %vm1651, %v1650, %v1639
    %v1653 = vld [vmem:[%s9] sm:$0xff]
    %v1654 = vld [vmem:[%s9 + $0x8] sm:$0xff]
    %v1655 = vld [vmem:[%s9 + $0x10] sm:$0xff]
    %v1656 = vld [vmem:[%s9 + $0x18] sm:$0xff]
    %v1657 = vld [vmem:[%s9 + $0x20] sm:$0xff]
    %v1658 = vld [vmem:[%s9 + $0x28] sm:$0xff]
    %v1659 = vld [vmem:[%s9 + $0x30] sm:$0xff]
    %v1660 = vld [vmem:[%s9 + $0x38] sm:$0xff]
    %v1661 = vld [vmem:[%s9 + $0x40] sm:$0xff]
    %v1662 = vld [vmem:[%s9 + $0x48] sm:$0xff]
    %v1663 = vld [vmem:[%s9 + $0x50] sm:$0xff]
    %v1664 = vld [vmem:[%s9 + $0x58] sm:$0xff]
    %v1665 = vld [vmem:[%s9 + $0x60] sm:$0xff]
    %v1666 = vld [vmem:[%s9 + $0x68] sm:$0xff]
    %v1667 = vld [vmem:[%s9 + $0x70] sm:$0xff]
    %v1668 = vld [vmem:[%s9 + $0x78] sm:$0xff]
    %v1669 = vld [vmem:[%s10] sm:$0x1]
    %v1671 = vlaneseq
    %v1672 = vshrl.u32 %v1671, 7
    %v1673 = vsub.s32 0, %v1672
    %v1674 = vrot.slane %v1669, %v1673
    %1676 = vmatprep.subr.mxu0 0.0
    %1677 = vmatpush1.msra.mxu0 %v1668
    %1678 = vmatprep.subr.mxu0 0.0
    %1679 = vmatpush1.msra.mxu0 %v1667
    %1680 = vmatprep.subr.mxu0 0.0
    %1681 = vmatpush1.msra.mxu0 %v1666
    %1682 = vmatprep.subr.mxu0 0.0
    %1683 = vmatpush1.msra.mxu0 %v1665
    %1684 = vmatprep.subr.mxu0 0.0
    %1685 = vmatpush1.msra.mxu0 %v1664
    %1686 = vmatprep.subr.mxu0 0.0
    %1687 = vmatpush1.msra.mxu0 %v1663
    %1688 = vmatprep.subr.mxu0 0.0
    %1689 = vmatpush1.msra.mxu0 %v1662
    %1690 = vmatprep.subr.mxu0 0.0
    %1691 = vmatpush1.msra.mxu0 %v1661
    %1692 = vmatprep.subr.mxu0 0.0
    %1693 = vmatpush1.msra.mxu0 %v1660
    %1694 = vmatprep.subr.mxu0 0.0
    %1695 = vmatpush1.msra.mxu0 %v1659
    %1696 = vmatprep.subr.mxu0 0.0
    %1697 = vmatpush1.msra.mxu0 %v1658
    %1698 = vmatprep.subr.mxu0 0.0
    %1699 = vmatpush1.msra.mxu0 %v1657
    %1700 = vmatprep.subr.mxu0 0.0
    %1701 = vmatpush1.msra.mxu0 %v1656
    %1702 = vmatprep.subr.mxu0 0.0
    %1703 = vmatpush1.msra.mxu0 %v1655
    %1704 = vmatprep.subr.mxu0 0.0
    %1705 = vmatpush1.msra.mxu0 %v1654
    %1706 = vmatprep.subr.mxu0 0.0
    %1707 = vmatpush1.msra.mxu0 %v1653
    %1708 = vmatprep.subr.mxu0 0.0
    %1709 = vmatpush2.msra.mxu0 0.0
    %1710 = vmatprep.subr.mxu0 0.0
    %1711 = vmatpush2.msra.mxu0 0.0
    %1712 = vmatprep.subr.mxu0 0.0
    %1713 = vmatpush2.msra.mxu0 0.0
    %1714 = vmatprep.subr.mxu0 0.0
    %1715 = vmatpush2.msra.mxu0 0.0
    %1716 = vmatprep.subr.mxu0 0.0
    %1717 = vmatpush2.msra.mxu0 0.0
    %1718 = vmatprep.subr.mxu0 0.0
    %1719 = vmatpush2.msra.mxu0 0.0
    %1720 = vmatprep.subr.mxu0 0.0
    %1721 = vmatpush2.msra.mxu0 0.0
    %1722 = vmatprep.subr.mxu0 0.0
    %1723 = vmatpush2.msra.mxu0 0.0
    %1724 = vmatprep.subr.mxu0 0.0
    %1725 = vmatpush2.msra.mxu0 0.0
    %1726 = vmatprep.subr.mxu0 0.0
    %1727 = vmatpush2.msra.mxu0 0.0
    %1728 = vmatprep.subr.mxu0 0.0
    %1729 = vmatpush2.msra.mxu0 0.0
    %1730 = vmatprep.subr.mxu0 0.0
    %1731 = vmatpush2.msra.mxu0 0.0
    %1732 = vmatprep.subr.mxu0 0.0
    %1733 = vmatpush2.msra.mxu0 0.0
    %1734 = vmatprep.subr.mxu0 0.0
    %1735 = vmatpush2.msra.mxu0 0.0
    %1736 = vmatprep.subr.mxu0 0.0
    %1737 = vmatpush2.msra.mxu0 0.0
    %1738 = vmatprep.subr.mxu0 0.0
    %1739 = vmatpush2.msra.mxu0 0.0
    %1740 = vmatprep.mubr.f32.mxu0 0.0
    %1741 = vmatmul.mubr.f32.gmra.mxu0 %v1652
    %v1742 = vpop.f32.mrf.mxu0
    %v1743 = vadd.f32 %v1674, %v1742
    %v1744 = vpop.f32.mrf.mxu0
    %1745 = vdwg.mxu0
    %1746 = vst.msk [vmem:[#allocation2] sm:$0xff] %vm53, %v1743
    // Predicated region
    $region46: #{tpu_custom_call.1} parent=1 // pred_check
      _
    $region47: #{tpu_custom_call.1} parent=1 // pred_check_branch
      %1748 = sbr.rel (0) target = $region49
    $region48: #{tpu_custom_call.1} parent=1 // pred_region
      %s1750 = ssub.s32 128, 128
      %1751 = vsyncadd [#allocation3], %s1750
      %s1753 = sshll.u32 [#allocation2], 4
      %s1754 = int_to_ptr.vmem [resolvable:$true] %s1753
      %1756 = dma.vmem_to_hbm [thread:$0]  %s1754, 128, %s11, [#allocation3]
    $region49: #{tpu_custom_call.1} parent=1 // pred_fallthru
      _
    // Predicated region
    $region50: #{tpu_custom_call.1} parent=1 // pred_check
      _
    $region51: #{tpu_custom_call.1} parent=1 // pred_check_branch
      %1758 = sbr.rel (0) target = $region53
    $region52: #{tpu_custom_call.1} parent=1 // pred_region
      %1759 = dma.done [#allocation3], 128
    $region53: #{tpu_custom_call.1} parent=1 // pred_fallthru
      _
    %1760 = vsyncpa [#allocation3], 1

</llo_original>
